<compile_context>
chip_gen: v5e
topology: v5e:2x2
jax: 0.10.0
libtpu: 0.0.40
codegen_flags: <defaults>
</compile_context>

<pallas_src>
import jax
import jax.numpy as jnp
import numpy as np
from jax import lax
from jax.experimental import pallas as pl
from jax.experimental.pallas import tpu as pltpu


# --------------------- Kernel A: masked GRU recurrence (single grid step) ---------------------
def gru_recurrence_kernel(ylen_ref, gir_ref, giz_ref, gin_ref,
                          whr_ref, whz_ref, whn_ref, bhn_ref, h0_ref,
                          out_ref, hid_ref):
    T = gir_ref.shape[0]
    ylen = ylen_ref[...]                       # (Bp, 1) int32
    whr = whr_ref[...]                         # (H, H) transposed per-gate hidden weights
    whz = whz_ref[...]
    whn = whn_ref[...]
    bhn = bhn_ref[...]                         # (1, H)

    def step(t, h):
        # Only hidden projections remain in the serial loop; input projections (+ biases)
        # were hoisted into gi_r/gi_z/gi_n in the wrapper as one big matmul.
        r = jax.nn.sigmoid(gir_ref[t] + jnp.dot(h, whr, preferred_element_type=jnp.float32))
        z = jax.nn.sigmoid(giz_ref[t] + jnp.dot(h, whz, preferred_element_type=jnp.float32))
        n = jnp.tanh(gin_ref[t] + r * (jnp.dot(h, whn, preferred_element_type=jnp.float32) + bhn))
        h_new = (1.0 - z) * n + z * h
        valid = t < ylen                       # (Bp, 1) bool
        h_next = jnp.where(valid, h_new, h)    # freeze hidden past length (packed-seq semantics)
        out_ref[t] = jnp.where(valid, h_next, 0.0)   # pad_packed_sequence zeros padded steps
        return h_next

    h_final = lax.fori_loop(0, T, step, h0_ref[...], unroll=True)
    hid_ref[...] = h_final


def _gru_pallas(gi_r, gi_z, gi_n, whh_r_t, whh_z_t, whh_n_t, bhh_n, h0, ylen):
    Ty, Bp, H = gi_r.shape

    def full(shape):
        return pl.BlockSpec(shape, lambda i: (0,) * len(shape))

    return pl.pallas_call(
        gru_recurrence_kernel,
        grid=(1,),                                         # whole sequence in one grid step
        in_specs=[full((Bp, 1)),
                  full((Ty, Bp, H)), full((Ty, Bp, H)), full((Ty, Bp, H)),
                  full((H, H)), full((H, H)), full((H, H)),
                  full((1, H)), full((Bp, H))],
        out_specs=[full((Ty, Bp, H)), full((Bp, H))],
        out_shape=(jax.ShapeDtypeStruct((Ty, Bp, H), jnp.float32),
                   jax.ShapeDtypeStruct((Bp, H), jnp.float32)),
        compiler_params=pltpu.CompilerParams(dimension_semantics=("arbitrary",)),
    )(ylen, gi_r, gi_z, gi_n, whh_r_t, whh_z_t, whh_n_t, bhh_n, h0)


# ------------- Kernel B: attention + linear_out + out projection + log_softmax -------------
def attention_output_kernel(ylen_ref, clen_ref, oseq_ref, ctx_ref,
                            win_ref, woc_ref, woo_ref, bo_ref, wv_ref, bv_ref,
                            logp_ref, attn_ref):
    b = pl.program_id(0)
    yl = ylen_ref[b]                            # scalar int32 from SMEM
    cl = clen_ref[b]

    o = oseq_ref[0]                             # (Ty, D)   decoder GRU outputs for this batch row
    c = ctx_ref[0]                              # (Tc, 2H)  encoder context

    # attn = output @ (context @ W_in^T)^T
    ctx_in = jnp.dot(c, win_ref[...], preferred_element_type=jnp.float32)                 # (Tc, D)
    scores = jnp.einsum('yd,td->yt', o, ctx_in, preferred_element_type=jnp.float32)       # (Ty, Tc)

    Ty, Tc = scores.shape
    iy = lax.broadcasted_iota(jnp.int32, (Ty, Tc), 0)
    ic = lax.broadcasted_iota(jnp.int32, (Ty, Tc), 1)
    valid = (iy < yl) & (ic < cl)               # create_mask(y_lengths, ctx_lengths) semantics
    scores = jnp.where(valid, scores, -1000000.0)

    m = jnp.max(scores, axis=-1, keepdims=True)
    e = jnp.exp(scores - m)
    attn = e / jnp.sum(e, axis=-1, keepdims=True)
    attn_ref[0] = attn

    ctxv = jnp.dot(attn, c, preferred_element_type=jnp.float32)                           # (Ty, 2H)
    # linear_out(cat([ctxv, o])) without materializing the concat
    pre = (jnp.dot(ctxv, woc_ref[...], preferred_element_type=jnp.float32)
           + jnp.dot(o, woo_ref[...], preferred_element_type=jnp.float32)
           + bo_ref[...])
    a = jnp.tanh(pre)                                                                     # (Ty, D)

    logits = jnp.dot(a, wv_ref[...], preferred_element_type=jnp.float32) + bv_ref[...]    # (Ty, V)
    lm = jnp.max(logits, axis=-1, keepdims=True)
    shifted = logits - lm
    lse = jnp.log(jnp.sum(jnp.exp(shifted), axis=-1, keepdims=True))
    logp_ref[0] = shifted - lse                 # log_softmax


def _attention_pallas(out_seq, ctx, y_lengths, ctx_lengths,
                      w_in_t, w_out_c_t, w_out_o_t, b_out, w_v_t, b_v):
    B, Ty, D = out_seq.shape
    _, Tc, C2 = ctx.shape
    V = w_v_t.shape[1]
    smem = pl.BlockSpec(memory_space=pltpu.MemorySpace.SMEM)

    def wspec(shape):
        return pl.BlockSpec(shape, lambda b: (0,) * len(shape))

    return pl.pallas_call(
        attention_output_kernel,
        grid=(B,),
        in_specs=[smem, smem,
                  pl.BlockSpec((1, Ty, D), lambda b: (b, 0, 0)),
                  pl.BlockSpec((1, Tc, C2), lambda b: (b, 0, 0)),
                  wspec((C2, D)), wspec((C2, D)), wspec((D, D)), wspec((1, D)),
                  wspec((D, V)), wspec((1, V))],
        out_specs=[pl.BlockSpec((1, Ty, V), lambda b: (b, 0, 0)),
                   pl.BlockSpec((1, Ty, Tc), lambda b: (b, 0, 0))],
        out_shape=(jax.ShapeDtypeStruct((B, Ty, V), jnp.float32),
                   jax.ShapeDtypeStruct((B, Ty, Tc), jnp.float32)),
        compiler_params=pltpu.CompilerParams(dimension_semantics=("parallel",)),
    )(y_lengths, ctx_lengths, out_seq, ctx,
      w_in_t, w_out_c_t, w_out_o_t, b_out, w_v_t, b_v)


# -------------------------------------- wrapper ---------------------------------------------
def decoder_forward(ctx, ctx_lengths, y, y_lengths, hid, params):
    """Decoder.forward (eval mode). Returns (log_probs (B,Ty,V), hid (1,B,H), attn (B,Ty,Tc))."""
    B, Ty = y.shape
    H = params["w_hh"].shape[1]          # GRU hidden == enc_hidden_size (== dec_hidden_size)
    C2 = params["w_in"].shape[1]         # 2 * enc_hidden_size
    V = params["w_vocab"].shape[0]

    y_lengths = y_lengths.astype(jnp.int32)
    ctx_lengths = ctx_lengths.astype(jnp.int32)

    # glue (plain JAX): embedding gather + eval-mode dropout (identity)
    emb = params["embed"][y].astype(jnp.float32)                              # (B, Ty, E)

    # hoisted input projection: ONE big matmul over all timesteps
    gi = jnp.einsum('bte,ge->btg', emb, params["w_ih"]) + params["b_ih"]      # (B, Ty, 3H)
    b_hh = params["b_hh"]
    gi_r = gi[..., :H] + b_hh[:H]                 # fold b_hh into r/z gates (wrapper-side)
    gi_z = gi[..., H:2 * H] + b_hh[H:2 * H]
    gi_n = gi[..., 2 * H:]                        # b_hh_n stays inside r*(...) in the kernel

    Bp = ((B + 7) // 8) * 8                       # pad batch to the f32 sublane tile

    def to_time_major(a):                         # (B, Ty, H) -> (Ty, Bp, H)
        a = jnp.transpose(a, (1, 0, 2))
        return jnp.pad(a, ((0, 0), (0, Bp - B), (0, 0)))

    gi_r, gi_z, gi_n = to_time_major(gi_r), to_time_major(gi_z), to_time_major(gi_n)
    h0 = jnp.pad(hid[0].astype(jnp.float32), ((0, Bp - B), (0, 0)))           # (Bp, H)
    ylen_p = jnp.pad(y_lengths, (0, Bp - B))[:, None]                         # (Bp, 1)

    whh = params["w_hh"]                          # per-gate split so kernel never lane-slices
    whh_r_t = whh[:H].T
    whh_z_t = whh[H:2 * H].T
    whh_n_t = whh[2 * H:].T
    bhh_n = b_hh[2 * H:][None, :]

    out_seq_tm, hid_p = _gru_pallas(gi_r, gi_z, gi_n,
                                    whh_r_t, whh_z_t, whh_n_t, bhh_n, h0, ylen_p)
    out_seq = jnp.transpose(out_seq_tm[:, :B], (1, 0, 2))                     # (B, Ty, H)
    hid_out = hid_p[:B][None]                                                 # (1, B, H)

    # attention / output-head weights, transposed for lane-dense in-kernel matmuls
    w_in_t = params["w_in"].T                                                 # (2H, D)
    w_out = params["w_out"]
    w_out_c_t = w_out[:, :C2].T                                               # (2H, D)
    w_out_o_t = w_out[:, C2:].T                                               # (D, D)
    b_out = params["b_out"][None, :]
    w_v_t = params["w_vocab"].T                                               # (D, V)
    b_v = params["b_vocab"][None, :]

    logp, attn = _attention_pallas(out_seq, ctx.astype(jnp.float32), y_lengths, ctx_lengths,
                                   w_in_t, w_out_c_t, w_out_o_t, b_out, w_v_t, b_v)
    return logp, hid_out, attn


# ---------------------------------- pure-JAX reference --------------------------------------
def decoder_forward_ref(ctx, ctx_lengths, y, y_lengths, hid, params):
    B, Ty = y.shape
    H = params["w_hh"].shape[1]
    emb = params["embed"][y].astype(jnp.float32)
    w_ih, w_hh = params["w_ih"], params["w_hh"]
    b_ih, b_hh = params["b_ih"], params["b_hh"]
    h = hid[0].astype(jnp.float32)
    ylen = y_lengths.astype(jnp.int32)[:, None]
    outs = []
    for t in range(Ty):
        gi = emb[:, t] @ w_ih.T + b_ih
        gh = h @ w_hh.T + b_hh
        r = jax.nn.sigmoid(gi[:, :H] + gh[:, :H])
        z = jax.nn.sigmoid(gi[:, H:2 * H] + gh[:, H:2 * H])
        n = jnp.tanh(gi[:, 2 * H:] + r * gh[:, 2 * H:])
        h_new = (1.0 - z) * n + z * h
        valid = t < ylen
        h = jnp.where(valid, h_new, h)
        outs.append(jnp.where(valid, h, 0.0))
    out_seq = jnp.stack(outs, axis=1)                                         # (B, Ty, H)

    Tc = ctx.shape[1]
    ctx_in = jnp.einsum('btk,dk->btd', ctx, params["w_in"])
    scores = jnp.einsum('byd,btd->byt', out_seq, ctx_in)
    ymask = jnp.arange(Ty)[None, :] < y_lengths[:, None]
    cmask = jnp.arange(Tc)[None, :] < ctx_lengths[:, None]
    valid = ymask[:, :, None] & cmask[:, None, :]
    scores = jnp.where(valid, scores, -1000000.0)
    attn = jax.nn.softmax(scores, axis=-1)
    ctxv = jnp.einsum('byt,btk->byk', attn, ctx)
    cat = jnp.concatenate([ctxv, out_seq], axis=-1)
    a = jnp.tanh(cat @ params["w_out"].T + params["b_out"])
    logits = a @ params["w_vocab"].T + params["b_vocab"]
    logp = jax.nn.log_softmax(logits, axis=-1)
    return logp, h[None], attn


# ----------------------------------------- main ---------------------------------------------
if __name__ == "__main__":
    vocab_size, embed_size = 50, 16
    enc_hidden = dec_hidden = 32      # attention requires GRU hidden == dec_hidden
    B, Ty, Tc = 4, 8, 10

    key = jax.random.PRNGKey(0)
    ks = jax.random.split(key, 14)
    init = lambda k, shape: (0.1 * jax.random.normal(k, shape)).astype(jnp.float32)

    H, D, V, E = enc_hidden, dec_hidden, vocab_size, embed_size
    params = {
        "embed":   init(ks[0], (V, E)),
        "w_ih":    init(ks[1], (3 * H, E)),
        "w_hh":    init(ks[2], (3 * H, H)),
        "b_ih":    init(ks[3], (3 * H,)),
        "b_hh":    init(ks[4], (3 * H,)),
        "w_in":    init(ks[5], (D, 2 * H)),          # linear_in (no bias)
        "w_out":   init(ks[6], (D, 2 * H + D)),      # linear_out
        "b_out":   init(ks[7], (D,)),
        "w_vocab": init(ks[8], (V, D)),              # self.out
        "b_vocab": init(ks[9], (V,)),
    }

    ctx = init(ks[10], (B, Tc, 2 * H))
    hid = init(ks[11], (1, B, H))
    y = jax.random.randint(ks[12], (B, Ty), 0, V, dtype=jnp.int32)
    y_lengths = jnp.array([8, 5, 3, 6], dtype=jnp.int32)        # max == Ty
    ctx_lengths = jnp.array([10, 7, 10, 4], dtype=jnp.int32)    # max == Tc

    logp, hid_out, attn = decoder_forward(ctx, ctx_lengths, y, y_lengths, hid, params)
    logp = jax.block_until_ready(logp)
    hid_out = jax.block_until_ready(hid_out)
    attn = jax.block_until_ready(attn)

    logp_ref, hid_ref, attn_ref = decoder_forward_ref(ctx, ctx_lengths, y, y_lengths, hid, params)

    np.testing.assert_allclose(np.asarray(hid_out), np.asarray(hid_ref), rtol=2e-5, atol=2e-5)
    np.testing.assert_allclose(np.asarray(attn), np.asarray(attn_ref), rtol=2e-5, atol=2e-5)
    np.testing.assert_allclose(np.asarray(logp), np.asarray(logp_ref), rtol=2e-5, atol=2e-5)

    print("KERNEL_OK")
</pallas_src>

<mosaic_0001>
module attributes {stable_mosaic.version = 11 : i64} {
  func.func @gru_recurrence_kernel(%arg0: i32, %arg1: memref<8x1xi32, #tpu.memory_space<vmem>>, %arg2: memref<8x8x32xf32, #tpu.memory_space<vmem>>, %arg3: memref<8x8x32xf32, #tpu.memory_space<vmem>>, %arg4: memref<8x8x32xf32, #tpu.memory_space<vmem>>, %arg5: memref<32x32xf32, #tpu.memory_space<vmem>>, %arg6: memref<32x32xf32, #tpu.memory_space<vmem>>, %arg7: memref<32x32xf32, #tpu.memory_space<vmem>>, %arg8: memref<1x32xf32, #tpu.memory_space<vmem>>, %arg9: memref<8x32xf32, #tpu.memory_space<vmem>>, %arg10: memref<8x8x32xf32, #tpu.memory_space<vmem>>, %arg11: memref<8x32xf32, #tpu.memory_space<vmem>>) attributes {dimension_semantics = [#tpu.dimension_semantics<arbitrary>], iteration_bounds = array<i64: 1>, scalar_prefetch = 0 : i64, scratch_operands = 0 : i64, tpu.core_type = #tpu.core_type<tc>, window_params = [{pipeline_mode = #tpu.pipeline_mode<synchronous>, transform_indices = @transform_0, window_bounds = array<i64: 8, 1>}, {pipeline_mode = #tpu.pipeline_mode<synchronous>, transform_indices = @transform_1, window_bounds = array<i64: 8, 8, 32>}, {pipeline_mode = #tpu.pipeline_mode<synchronous>, transform_indices = @transform_2, window_bounds = array<i64: 8, 8, 32>}, {pipeline_mode = #tpu.pipeline_mode<synchronous>, transform_indices = @transform_3, window_bounds = array<i64: 8, 8, 32>}, {pipeline_mode = #tpu.pipeline_mode<synchronous>, transform_indices = @transform_4, window_bounds = array<i64: 32, 32>}, {pipeline_mode = #tpu.pipeline_mode<synchronous>, transform_indices = @transform_5, window_bounds = array<i64: 32, 32>}, {pipeline_mode = #tpu.pipeline_mode<synchronous>, transform_indices = @transform_6, window_bounds = array<i64: 32, 32>}, {pipeline_mode = #tpu.pipeline_mode<synchronous>, transform_indices = @transform_7, window_bounds = array<i64: 1, 32>}, {pipeline_mode = #tpu.pipeline_mode<synchronous>, transform_indices = @transform_8, window_bounds = array<i64: 8, 32>}, {pipeline_mode = #tpu.pipeline_mode<synchronous>, transform_indices = @transform_9, window_bounds = array<i64: 8, 8, 32>}, {pipeline_mode = #tpu.pipeline_mode<synchronous>, transform_indices = @transform_10, window_bounds = array<i64: 8, 32>}]} {
    %c0 = arith.constant 0 : index
    %c0_0 = arith.constant 0 : index
    %0 = vector.load %arg1[%c0, %c0_0] : memref<8x1xi32, #tpu.memory_space<vmem>>, vector<8x1xi32>
    %c0_1 = arith.constant 0 : index
    %c0_2 = arith.constant 0 : index
    %1 = vector.load %arg5[%c0_1, %c0_2] : memref<32x32xf32, #tpu.memory_space<vmem>>, vector<32x32xf32>
    %c0_3 = arith.constant 0 : index
    %c0_4 = arith.constant 0 : index
    %2 = vector.load %arg6[%c0_3, %c0_4] : memref<32x32xf32, #tpu.memory_space<vmem>>, vector<32x32xf32>
    %c0_5 = arith.constant 0 : index
    %c0_6 = arith.constant 0 : index
    %3 = vector.load %arg7[%c0_5, %c0_6] : memref<32x32xf32, #tpu.memory_space<vmem>>, vector<32x32xf32>
    %c0_7 = arith.constant 0 : index
    %c0_8 = arith.constant 0 : index
    %4 = vector.load %arg8[%c0_7, %c0_8] : memref<1x32xf32, #tpu.memory_space<vmem>>, vector<1x32xf32>
    %c0_9 = arith.constant 0 : index
    %c0_10 = arith.constant 0 : index
    %5 = vector.load %arg9[%c0_9, %c0_10] : memref<8x32xf32, #tpu.memory_space<vmem>>, vector<8x32xf32>
    %c0_i32 = arith.constant 0 : i32
    %6 = arith.index_cast %c0_i32 : i32 to index
    %c0_11 = arith.constant 0 : index
    %c0_12 = arith.constant 0 : index
    %7 = vector.load %arg2[%6, %c0_11, %c0_12] : memref<8x8x32xf32, #tpu.memory_space<vmem>>, vector<1x8x32xf32>
    %8 = vector.shape_cast %7 : vector<1x8x32xf32> to vector<8x32xf32>
    %cst = arith.constant dense<0.000000e+00> : vector<8x32xf32>
    %9 = tpu.matmul %5, %1, %cst {dimension_numbers = #tpu.dot_dimension_numbers<[1], [0], [0], [1], [0, 0, 1, 1], [], []>} : vector<8x32xf32>, vector<32x32xf32>, vector<8x32xf32> -> vector<8x32xf32>
    %10 = arith.addf %8, %9 : vector<8x32xf32>
    %11 = arith.negf %10 : vector<8x32xf32>
    %12 = math.exp %11 : vector<8x32xf32>
    %cst_13 = arith.constant 1.000000e+00 : f32
    %13 = vector.broadcast %cst_13 : f32 to vector<8x32xf32>
    %14 = arith.addf %13, %12 : vector<8x32xf32>
    %15 = arith.divf %13, %14 : vector<8x32xf32>
    %16 = arith.index_cast %c0_i32 : i32 to index
    %c0_14 = arith.constant 0 : index
    %c0_15 = arith.constant 0 : index
    %17 = vector.load %arg3[%16, %c0_14, %c0_15] : memref<8x8x32xf32, #tpu.memory_space<vmem>>, vector<1x8x32xf32>
    %18 = vector.shape_cast %17 : vector<1x8x32xf32> to vector<8x32xf32>
    %cst_16 = arith.constant dense<0.000000e+00> : vector<8x32xf32>
    %19 = tpu.matmul %5, %2, %cst_16 {dimension_numbers = #tpu.dot_dimension_numbers<[1], [0], [0], [1], [0, 0, 1, 1], [], []>} : vector<8x32xf32>, vector<32x32xf32>, vector<8x32xf32> -> vector<8x32xf32>
    %20 = arith.addf %18, %19 : vector<8x32xf32>
    %21 = arith.negf %20 : vector<8x32xf32>
    %22 = math.exp %21 : vector<8x32xf32>
    %cst_17 = arith.constant 1.000000e+00 : f32
    %23 = vector.broadcast %cst_17 : f32 to vector<8x32xf32>
    %24 = arith.addf %23, %22 : vector<8x32xf32>
    %25 = arith.divf %23, %24 : vector<8x32xf32>
    %26 = arith.index_cast %c0_i32 : i32 to index
    %c0_18 = arith.constant 0 : index
    %c0_19 = arith.constant 0 : index
    %27 = vector.load %arg4[%26, %c0_18, %c0_19] : memref<8x8x32xf32, #tpu.memory_space<vmem>>, vector<1x8x32xf32>
    %28 = vector.shape_cast %27 : vector<1x8x32xf32> to vector<8x32xf32>
    %cst_20 = arith.constant dense<0.000000e+00> : vector<8x32xf32>
    %29 = tpu.matmul %5, %3, %cst_20 {dimension_numbers = #tpu.dot_dimension_numbers<[1], [0], [0], [1], [0, 0, 1, 1], [], []>} : vector<8x32xf32>, vector<32x32xf32>, vector<8x32xf32> -> vector<8x32xf32>
    %30 = vector.broadcast %4 : vector<1x32xf32> to vector<8x32xf32>
    %31 = arith.addf %29, %30 : vector<8x32xf32>
    %32 = arith.mulf %15, %31 : vector<8x32xf32>
    %33 = arith.addf %28, %32 : vector<8x32xf32>
    %34 = math.tanh %33 : vector<8x32xf32>
    %cst_21 = arith.constant 1.000000e+00 : f32
    %35 = vector.broadcast %cst_21 : f32 to vector<8x32xf32>
    %36 = arith.subf %35, %25 : vector<8x32xf32>
    %37 = arith.mulf %36, %34 : vector<8x32xf32>
    %38 = arith.mulf %25, %5 : vector<8x32xf32>
    %39 = arith.addf %37, %38 : vector<8x32xf32>
    %40 = vector.broadcast %c0_i32 : i32 to vector<8x1xi32>
    %41 = arith.cmpi slt, %40, %0 : vector<8x1xi32>
    %42 = vector.shape_cast %41 : vector<8x1xi1> to vector<8x1xi1>
    %43 = vector.broadcast %42 : vector<8x1xi1> to vector<8x32xi1>
    %44 = arith.select %43, %39, %5 : vector<8x32xi1>, vector<8x32xf32>
    %cst_22 = arith.constant 0.000000e+00 : f32
    %45 = vector.shape_cast %41 : vector<8x1xi1> to vector<8x1xi1>
    %46 = vector.broadcast %45 : vector<8x1xi1> to vector<8x32xi1>
    %47 = vector.broadcast %cst_22 : f32 to vector<8x32xf32>
    %48 = arith.select %46, %44, %47 : vector<8x32xi1>, vector<8x32xf32>
    %49 = arith.index_cast %c0_i32 : i32 to index
    %c0_23 = arith.constant 0 : index
    %c0_24 = arith.constant 0 : index
    %50 = vector.load %arg10[%49, %c0_23, %c0_24] : memref<8x8x32xf32, #tpu.memory_space<vmem>>, vector<1x8x32xf32>
    %51 = vector.shape_cast %50 : vector<1x8x32xf32> to vector<8x32xf32>
    %52 = vector.shape_cast %48 : vector<8x32xf32> to vector<1x8x32xf32>
    tpu.vector_store %arg10[%49, %c0_23, %c0_24], %52 {strides = array<i32>} : memref<8x8x32xf32, #tpu.memory_space<vmem>>, vector<1x8x32xf32>,
    %c1_i32 = arith.constant 1 : i32
    %53 = arith.index_cast %c1_i32 : i32 to index
    %c0_25 = arith.constant 0 : index
    %c0_26 = arith.constant 0 : index
    %54 = vector.load %arg2[%53, %c0_25, %c0_26] : memref<8x8x32xf32, #tpu.memory_space<vmem>>, vector<1x8x32xf32>
    %55 = vector.shape_cast %54 : vector<1x8x32xf32> to vector<8x32xf32>
    %cst_27 = arith.constant dense<0.000000e+00> : vector<8x32xf32>
    %56 = tpu.matmul %44, %1, %cst_27 {dimension_numbers = #tpu.dot_dimension_numbers<[1], [0], [0], [1], [0, 0, 1, 1], [], []>} : vector<8x32xf32>, vector<32x32xf32>, vector<8x32xf32> -> vector<8x32xf32>
    %57 = arith.addf %55, %56 : vector<8x32xf32>
    %58 = arith.negf %57 : vector<8x32xf32>
    %59 = math.exp %58 : vector<8x32xf32>
    %cst_28 = arith.constant 1.000000e+00 : f32
    %60 = vector.broadcast %cst_28 : f32 to vector<8x32xf32>
    %61 = arith.addf %60, %59 : vector<8x32xf32>
    %62 = arith.divf %60, %61 : vector<8x32xf32>
    %63 = arith.index_cast %c1_i32 : i32 to index
    %c0_29 = arith.constant 0 : index
    %c0_30 = arith.constant 0 : index
    %64 = vector.load %arg3[%63, %c0_29, %c0_30] : memref<8x8x32xf32, #tpu.memory_space<vmem>>, vector<1x8x32xf32>
    %65 = vector.shape_cast %64 : vector<1x8x32xf32> to vector<8x32xf32>
    %cst_31 = arith.constant dense<0.000000e+00> : vector<8x32xf32>
    %66 = tpu.matmul %44, %2, %cst_31 {dimension_numbers = #tpu.dot_dimension_numbers<[1], [0], [0], [1], [0, 0, 1, 1], [], []>} : vector<8x32xf32>, vector<32x32xf32>, vector<8x32xf32> -> vector<8x32xf32>
    %67 = arith.addf %65, %66 : vector<8x32xf32>
    %68 = arith.negf %67 : vector<8x32xf32>
    %69 = math.exp %68 : vector<8x32xf32>
    %cst_32 = arith.constant 1.000000e+00 : f32
    %70 = vector.broadcast %cst_32 : f32 to vector<8x32xf32>
    %71 = arith.addf %70, %69 : vector<8x32xf32>
    %72 = arith.divf %70, %71 : vector<8x32xf32>
    %73 = arith.index_cast %c1_i32 : i32 to index
    %c0_33 = arith.constant 0 : index
    %c0_34 = arith.constant 0 : index
    %74 = vector.load %arg4[%73, %c0_33, %c0_34] : memref<8x8x32xf32, #tpu.memory_space<vmem>>, vector<1x8x32xf32>
    %75 = vector.shape_cast %74 : vector<1x8x32xf32> to vector<8x32xf32>
    %cst_35 = arith.constant dense<0.000000e+00> : vector<8x32xf32>
    %76 = tpu.matmul %44, %3, %cst_35 {dimension_numbers = #tpu.dot_dimension_numbers<[1], [0], [0], [1], [0, 0, 1, 1], [], []>} : vector<8x32xf32>, vector<32x32xf32>, vector<8x32xf32> -> vector<8x32xf32>
    %77 = vector.broadcast %4 : vector<1x32xf32> to vector<8x32xf32>
    %78 = arith.addf %76, %77 : vector<8x32xf32>
    %79 = arith.mulf %62, %78 : vector<8x32xf32>
    %80 = arith.addf %75, %79 : vector<8x32xf32>
    %81 = math.tanh %80 : vector<8x32xf32>
    %cst_36 = arith.constant 1.000000e+00 : f32
    %82 = vector.broadcast %cst_36 : f32 to vector<8x32xf32>
    %83 = arith.subf %82, %72 : vector<8x32xf32>
    %84 = arith.mulf %83, %81 : vector<8x32xf32>
    %85 = arith.mulf %72, %44 : vector<8x32xf32>
    %86 = arith.addf %84, %85 : vector<8x32xf32>
    %87 = vector.broadcast %c1_i32 : i32 to vector<8x1xi32>
    %88 = arith.cmpi slt, %87, %0 : vector<8x1xi32>
    %89 = vector.shape_cast %88 : vector<8x1xi1> to vector<8x1xi1>
    %90 = vector.broadcast %89 : vector<8x1xi1> to vector<8x32xi1>
    %91 = arith.select %90, %86, %44 : vector<8x32xi1>, vector<8x32xf32>
    %cst_37 = arith.constant 0.000000e+00 : f32
    %92 = vector.shape_cast %88 : vector<8x1xi1> to vector<8x1xi1>
    %93 = vector.broadcast %92 : vector<8x1xi1> to vector<8x32xi1>
    %94 = vector.broadcast %cst_37 : f32 to vector<8x32xf32>
    %95 = arith.select %93, %91, %94 : vector<8x32xi1>, vector<8x32xf32>
    %96 = arith.index_cast %c1_i32 : i32 to index
    %c0_38 = arith.constant 0 : index
    %c0_39 = arith.constant 0 : index
    %97 = vector.load %arg10[%96, %c0_38, %c0_39] : memref<8x8x32xf32, #tpu.memory_space<vmem>>, vector<1x8x32xf32>
    %98 = vector.shape_cast %97 : vector<1x8x32xf32> to vector<8x32xf32>
    %99 = vector.shape_cast %95 : vector<8x32xf32> to vector<1x8x32xf32>
    tpu.vector_store %arg10[%96, %c0_38, %c0_39], %99 {strides = array<i32>} : memref<8x8x32xf32, #tpu.memory_space<vmem>>, vector<1x8x32xf32>,
    %c2_i32 = arith.constant 2 : i32
    %100 = arith.index_cast %c2_i32 : i32 to index
    %c0_40 = arith.constant 0 : index
    %c0_41 = arith.constant 0 : index
    %101 = vector.load %arg2[%100, %c0_40, %c0_41] : memref<8x8x32xf32, #tpu.memory_space<vmem>>, vector<1x8x32xf32>
    %102 = vector.shape_cast %101 : vector<1x8x32xf32> to vector<8x32xf32>
    %cst_42 = arith.constant dense<0.000000e+00> : vector<8x32xf32>
    %103 = tpu.matmul %91, %1, %cst_42 {dimension_numbers = #tpu.dot_dimension_numbers<[1], [0], [0], [1], [0, 0, 1, 1], [], []>} : vector<8x32xf32>, vector<32x32xf32>, vector<8x32xf32> -> vector<8x32xf32>
    %104 = arith.addf %102, %103 : vector<8x32xf32>
    %105 = arith.negf %104 : vector<8x32xf32>
    %106 = math.exp %105 : vector<8x32xf32>
    %cst_43 = arith.constant 1.000000e+00 : f32
    %107 = vector.broadcast %cst_43 : f32 to vector<8x32xf32>
    %108 = arith.addf %107, %106 : vector<8x32xf32>
    %109 = arith.divf %107, %108 : vector<8x32xf32>
    %110 = arith.index_cast %c2_i32 : i32 to index
    %c0_44 = arith.constant 0 : index
    %c0_45 = arith.constant 0 : index
    %111 = vector.load %arg3[%110, %c0_44, %c0_45] : memref<8x8x32xf32, #tpu.memory_space<vmem>>, vector<1x8x32xf32>
    %112 = vector.shape_cast %111 : vector<1x8x32xf32> to vector<8x32xf32>
    %cst_46 = arith.constant dense<0.000000e+00> : vector<8x32xf32>
    %113 = tpu.matmul %91, %2, %cst_46 {dimension_numbers = #tpu.dot_dimension_numbers<[1], [0], [0], [1], [0, 0, 1, 1], [], []>} : vector<8x32xf32>, vector<32x32xf32>, vector<8x32xf32> -> vector<8x32xf32>
    %114 = arith.addf %112, %113 : vector<8x32xf32>
    %115 = arith.negf %114 : vector<8x32xf32>
    %116 = math.exp %115 : vector<8x32xf32>
    %cst_47 = arith.constant 1.000000e+00 : f32
    %117 = vector.broadcast %cst_47 : f32 to vector<8x32xf32>
    %118 = arith.addf %117, %116 : vector<8x32xf32>
    %119 = arith.divf %117, %118 : vector<8x32xf32>
    %120 = arith.index_cast %c2_i32 : i32 to index
    %c0_48 = arith.constant 0 : index
    %c0_49 = arith.constant 0 : index
    %121 = vector.load %arg4[%120, %c0_48, %c0_49] : memref<8x8x32xf32, #tpu.memory_space<vmem>>, vector<1x8x32xf32>
    %122 = vector.shape_cast %121 : vector<1x8x32xf32> to vector<8x32xf32>
    %cst_50 = arith.constant dense<0.000000e+00> : vector<8x32xf32>
    %123 = tpu.matmul %91, %3, %cst_50 {dimension_numbers = #tpu.dot_dimension_numbers<[1], [0], [0], [1], [0, 0, 1, 1], [], []>} : vector<8x32xf32>, vector<32x32xf32>, vector<8x32xf32> -> vector<8x32xf32>
    %124 = vector.broadcast %4 : vector<1x32xf32> to vector<8x32xf32>
    %125 = arith.addf %123, %124 : vector<8x32xf32>
    %126 = arith.mulf %109, %125 : vector<8x32xf32>
    %127 = arith.addf %122, %126 : vector<8x32xf32>
    %128 = math.tanh %127 : vector<8x32xf32>
    %cst_51 = arith.constant 1.000000e+00 : f32
    %129 = vector.broadcast %cst_51 : f32 to vector<8x32xf32>
    %130 = arith.subf %129, %119 : vector<8x32xf32>
    %131 = arith.mulf %130, %128 : vector<8x32xf32>
    %132 = arith.mulf %119, %91 : vector<8x32xf32>
    %133 = arith.addf %131, %132 : vector<8x32xf32>
    %134 = vector.broadcast %c2_i32 : i32 to vector<8x1xi32>
    %135 = arith.cmpi slt, %134, %0 : vector<8x1xi32>
    %136 = vector.shape_cast %135 : vector<8x1xi1> to vector<8x1xi1>
    %137 = vector.broadcast %136 : vector<8x1xi1> to vector<8x32xi1>
    %138 = arith.select %137, %133, %91 : vector<8x32xi1>, vector<8x32xf32>
    %cst_52 = arith.constant 0.000000e+00 : f32
    %139 = vector.shape_cast %135 : vector<8x1xi1> to vector<8x1xi1>
    %140 = vector.broadcast %139 : vector<8x1xi1> to vector<8x32xi1>
    %141 = vector.broadcast %cst_52 : f32 to vector<8x32xf32>
    %142 = arith.select %140, %138, %141 : vector<8x32xi1>, vector<8x32xf32>
    %143 = arith.index_cast %c2_i32 : i32 to index
    %c0_53 = arith.constant 0 : index
    %c0_54 = arith.constant 0 : index
    %144 = vector.load %arg10[%143, %c0_53, %c0_54] : memref<8x8x32xf32, #tpu.memory_space<vmem>>, vector<1x8x32xf32>
    %145 = vector.shape_cast %144 : vector<1x8x32xf32> to vector<8x32xf32>
    %146 = vector.shape_cast %142 : vector<8x32xf32> to vector<1x8x32xf32>
    tpu.vector_store %arg10[%143, %c0_53, %c0_54], %146 {strides = array<i32>} : memref<8x8x32xf32, #tpu.memory_space<vmem>>, vector<1x8x32xf32>,
    %c3_i32 = arith.constant 3 : i32
    %147 = arith.index_cast %c3_i32 : i32 to index
    %c0_55 = arith.constant 0 : index
    %c0_56 = arith.constant 0 : index
    %148 = vector.load %arg2[%147, %c0_55, %c0_56] : memref<8x8x32xf32, #tpu.memory_space<vmem>>, vector<1x8x32xf32>
    %149 = vector.shape_cast %148 : vector<1x8x32xf32> to vector<8x32xf32>
    %cst_57 = arith.constant dense<0.000000e+00> : vector<8x32xf32>
    %150 = tpu.matmul %138, %1, %cst_57 {dimension_numbers = #tpu.dot_dimension_numbers<[1], [0], [0], [1], [0, 0, 1, 1], [], []>} : vector<8x32xf32>, vector<32x32xf32>, vector<8x32xf32> -> vector<8x32xf32>
    %151 = arith.addf %149, %150 : vector<8x32xf32>
    %152 = arith.negf %151 : vector<8x32xf32>
    %153 = math.exp %152 : vector<8x32xf32>
    %cst_58 = arith.constant 1.000000e+00 : f32
    %154 = vector.broadcast %cst_58 : f32 to vector<8x32xf32>
    %155 = arith.addf %154, %153 : vector<8x32xf32>
    %156 = arith.divf %154, %155 : vector<8x32xf32>
    %157 = arith.index_cast %c3_i32 : i32 to index
    %c0_59 = arith.constant 0 : index
    %c0_60 = arith.constant 0 : index
    %158 = vector.load %arg3[%157, %c0_59, %c0_60] : memref<8x8x32xf32, #tpu.memory_space<vmem>>, vector<1x8x32xf32>
    %159 = vector.shape_cast %158 : vector<1x8x32xf32> to vector<8x32xf32>
    %cst_61 = arith.constant dense<0.000000e+00> : vector<8x32xf32>
    %160 = tpu.matmul %138, %2, %cst_61 {dimension_numbers = #tpu.dot_dimension_numbers<[1], [0], [0], [1], [0, 0, 1, 1], [], []>} : vector<8x32xf32>, vector<32x32xf32>, vector<8x32xf32> -> vector<8x32xf32>
    %161 = arith.addf %159, %160 : vector<8x32xf32>
    %162 = arith.negf %161 : vector<8x32xf32>
    %163 = math.exp %162 : vector<8x32xf32>
    %cst_62 = arith.constant 1.000000e+00 : f32
    %164 = vector.broadcast %cst_62 : f32 to vector<8x32xf32>
    %165 = arith.addf %164, %163 : vector<8x32xf32>
    %166 = arith.divf %164, %165 : vector<8x32xf32>
    %167 = arith.index_cast %c3_i32 : i32 to index
    %c0_63 = arith.constant 0 : index
    %c0_64 = arith.constant 0 : index
    %168 = vector.load %arg4[%167, %c0_63, %c0_64] : memref<8x8x32xf32, #tpu.memory_space<vmem>>, vector<1x8x32xf32>
    %169 = vector.shape_cast %168 : vector<1x8x32xf32> to vector<8x32xf32>
    %cst_65 = arith.constant dense<0.000000e+00> : vector<8x32xf32>
    %170 = tpu.matmul %138, %3, %cst_65 {dimension_numbers = #tpu.dot_dimension_numbers<[1], [0], [0], [1], [0, 0, 1, 1], [], []>} : vector<8x32xf32>, vector<32x32xf32>, vector<8x32xf32> -> vector<8x32xf32>
    %171 = vector.broadcast %4 : vector<1x32xf32> to vector<8x32xf32>
    %172 = arith.addf %170, %171 : vector<8x32xf32>
    %173 = arith.mulf %156, %172 : vector<8x32xf32>
    %174 = arith.addf %169, %173 : vector<8x32xf32>
    %175 = math.tanh %174 : vector<8x32xf32>
    %cst_66 = arith.constant 1.000000e+00 : f32
    %176 = vector.broadcast %cst_66 : f32 to vector<8x32xf32>
    %177 = arith.subf %176, %166 : vector<8x32xf32>
    %178 = arith.mulf %177, %175 : vector<8x32xf32>
    %179 = arith.mulf %166, %138 : vector<8x32xf32>
    %180 = arith.addf %178, %179 : vector<8x32xf32>
    %181 = vector.broadcast %c3_i32 : i32 to vector<8x1xi32>
    %182 = arith.cmpi slt, %181, %0 : vector<8x1xi32>
    %183 = vector.shape_cast %182 : vector<8x1xi1> to vector<8x1xi1>
    %184 = vector.broadcast %183 : vector<8x1xi1> to vector<8x32xi1>
    %185 = arith.select %184, %180, %138 : vector<8x32xi1>, vector<8x32xf32>
    %cst_67 = arith.constant 0.000000e+00 : f32
    %186 = vector.shape_cast %182 : vector<8x1xi1> to vector<8x1xi1>
    %187 = vector.broadcast %186 : vector<8x1xi1> to vector<8x32xi1>
    %188 = vector.broadcast %cst_67 : f32 to vector<8x32xf32>
    %189 = arith.select %187, %185, %188 : vector<8x32xi1>, vector<8x32xf32>
    %190 = arith.index_cast %c3_i32 : i32 to index
    %c0_68 = arith.constant 0 : index
    %c0_69 = arith.constant 0 : index
    %191 = vector.load %arg10[%190, %c0_68, %c0_69] : memref<8x8x32xf32, #tpu.memory_space<vmem>>, vector<1x8x32xf32>
    %192 = vector.shape_cast %191 : vector<1x8x32xf32> to vector<8x32xf32>
    %193 = vector.shape_cast %189 : vector<8x32xf32> to vector<1x8x32xf32>
    tpu.vector_store %arg10[%190, %c0_68, %c0_69], %193 {strides = array<i32>} : memref<8x8x32xf32, #tpu.memory_space<vmem>>, vector<1x8x32xf32>,
    %c4_i32 = arith.constant 4 : i32
    %194 = arith.index_cast %c4_i32 : i32 to index
    %c0_70 = arith.constant 0 : index
    %c0_71 = arith.constant 0 : index
    %195 = vector.load %arg2[%194, %c0_70, %c0_71] : memref<8x8x32xf32, #tpu.memory_space<vmem>>, vector<1x8x32xf32>
    %196 = vector.shape_cast %195 : vector<1x8x32xf32> to vector<8x32xf32>
    %cst_72 = arith.constant dense<0.000000e+00> : vector<8x32xf32>
    %197 = tpu.matmul %185, %1, %cst_72 {dimension_numbers = #tpu.dot_dimension_numbers<[1], [0], [0], [1], [0, 0, 1, 1], [], []>} : vector<8x32xf32>, vector<32x32xf32>, vector<8x32xf32> -> vector<8x32xf32>
    %198 = arith.addf %196, %197 : vector<8x32xf32>
    %199 = arith.negf %198 : vector<8x32xf32>
    %200 = math.exp %199 : vector<8x32xf32>
    %cst_73 = arith.constant 1.000000e+00 : f32
    %201 = vector.broadcast %cst_73 : f32 to vector<8x32xf32>
    %202 = arith.addf %201, %200 : vector<8x32xf32>
    %203 = arith.divf %201, %202 : vector<8x32xf32>
    %204 = arith.index_cast %c4_i32 : i32 to index
    %c0_74 = arith.constant 0 : index
    %c0_75 = arith.constant 0 : index
    %205 = vector.load %arg3[%204, %c0_74, %c0_75] : memref<8x8x32xf32, #tpu.memory_space<vmem>>, vector<1x8x32xf32>
    %206 = vector.shape_cast %205 : vector<1x8x32xf32> to vector<8x32xf32>
    %cst_76 = arith.constant dense<0.000000e+00> : vector<8x32xf32>
    %207 = tpu.matmul %185, %2, %cst_76 {dimension_numbers = #tpu.dot_dimension_numbers<[1], [0], [0], [1], [0, 0, 1, 1], [], []>} : vector<8x32xf32>, vector<32x32xf32>, vector<8x32xf32> -> vector<8x32xf32>
    %208 = arith.addf %206, %207 : vector<8x32xf32>
    %209 = arith.negf %208 : vector<8x32xf32>
    %210 = math.exp %209 : vector<8x32xf32>
    %cst_77 = arith.constant 1.000000e+00 : f32
    %211 = vector.broadcast %cst_77 : f32 to vector<8x32xf32>
    %212 = arith.addf %211, %210 : vector<8x32xf32>
    %213 = arith.divf %211, %212 : vector<8x32xf32>
    %214 = arith.index_cast %c4_i32 : i32 to index
    %c0_78 = arith.constant 0 : index
    %c0_79 = arith.constant 0 : index
    %215 = vector.load %arg4[%214, %c0_78, %c0_79] : memref<8x8x32xf32, #tpu.memory_space<vmem>>, vector<1x8x32xf32>
    %216 = vector.shape_cast %215 : vector<1x8x32xf32> to vector<8x32xf32>
    %cst_80 = arith.constant dense<0.000000e+00> : vector<8x32xf32>
    %217 = tpu.matmul %185, %3, %cst_80 {dimension_numbers = #tpu.dot_dimension_numbers<[1], [0], [0], [1], [0, 0, 1, 1], [], []>} : vector<8x32xf32>, vector<32x32xf32>, vector<8x32xf32> -> vector<8x32xf32>
    %218 = vector.broadcast %4 : vector<1x32xf32> to vector<8x32xf32>
    %219 = arith.addf %217, %218 : vector<8x32xf32>
    %220 = arith.mulf %203, %219 : vector<8x32xf32>
    %221 = arith.addf %216, %220 : vector<8x32xf32>
    %222 = math.tanh %221 : vector<8x32xf32>
    %cst_81 = arith.constant 1.000000e+00 : f32
    %223 = vector.broadcast %cst_81 : f32 to vector<8x32xf32>
    %224 = arith.subf %223, %213 : vector<8x32xf32>
    %225 = arith.mulf %224, %222 : vector<8x32xf32>
    %226 = arith.mulf %213, %185 : vector<8x32xf32>
    %227 = arith.addf %225, %226 : vector<8x32xf32>
    %228 = vector.broadcast %c4_i32 : i32 to vector<8x1xi32>
    %229 = arith.cmpi slt, %228, %0 : vector<8x1xi32>
    %230 = vector.shape_cast %229 : vector<8x1xi1> to vector<8x1xi1>
    %231 = vector.broadcast %230 : vector<8x1xi1> to vector<8x32xi1>
    %232 = arith.select %231, %227, %185 : vector<8x32xi1>, vector<8x32xf32>
    %cst_82 = arith.constant 0.000000e+00 : f32
    %233 = vector.shape_cast %229 : vector<8x1xi1> to vector<8x1xi1>
    %234 = vector.broadcast %233 : vector<8x1xi1> to vector<8x32xi1>
    %235 = vector.broadcast %cst_82 : f32 to vector<8x32xf32>
    %236 = arith.select %234, %232, %235 : vector<8x32xi1>, vector<8x32xf32>
    %237 = arith.index_cast %c4_i32 : i32 to index
    %c0_83 = arith.constant 0 : index
    %c0_84 = arith.constant 0 : index
    %238 = vector.load %arg10[%237, %c0_83, %c0_84] : memref<8x8x32xf32, #tpu.memory_space<vmem>>, vector<1x8x32xf32>
    %239 = vector.shape_cast %238 : vector<1x8x32xf32> to vector<8x32xf32>
    %240 = vector.shape_cast %236 : vector<8x32xf32> to vector<1x8x32xf32>
    tpu.vector_store %arg10[%237, %c0_83, %c0_84], %240 {strides = array<i32>} : memref<8x8x32xf32, #tpu.memory_space<vmem>>, vector<1x8x32xf32>,
    %c5_i32 = arith.constant 5 : i32
    %241 = arith.index_cast %c5_i32 : i32 to index
    %c0_85 = arith.constant 0 : index
    %c0_86 = arith.constant 0 : index
    %242 = vector.load %arg2[%241, %c0_85, %c0_86] : memref<8x8x32xf32, #tpu.memory_space<vmem>>, vector<1x8x32xf32>
    %243 = vector.shape_cast %242 : vector<1x8x32xf32> to vector<8x32xf32>
    %cst_87 = arith.constant dense<0.000000e+00> : vector<8x32xf32>
    %244 = tpu.matmul %232, %1, %cst_87 {dimension_numbers = #tpu.dot_dimension_numbers<[1], [0], [0], [1], [0, 0, 1, 1], [], []>} : vector<8x32xf32>, vector<32x32xf32>, vector<8x32xf32> -> vector<8x32xf32>
    %245 = arith.addf %243, %244 : vector<8x32xf32>
    %246 = arith.negf %245 : vector<8x32xf32>
    %247 = math.exp %246 : vector<8x32xf32>
    %cst_88 = arith.constant 1.000000e+00 : f32
    %248 = vector.broadcast %cst_88 : f32 to vector<8x32xf32>
    %249 = arith.addf %248, %247 : vector<8x32xf32>
    %250 = arith.divf %248, %249 : vector<8x32xf32>
    %251 = arith.index_cast %c5_i32 : i32 to index
    %c0_89 = arith.constant 0 : index
    %c0_90 = arith.constant 0 : index
    %252 = vector.load %arg3[%251, %c0_89, %c0_90] : memref<8x8x32xf32, #tpu.memory_space<vmem>>, vector<1x8x32xf32>
    %253 = vector.shape_cast %252 : vector<1x8x32xf32> to vector<8x32xf32>
    %cst_91 = arith.constant dense<0.000000e+00> : vector<8x32xf32>
    %254 = tpu.matmul %232, %2, %cst_91 {dimension_numbers = #tpu.dot_dimension_numbers<[1], [0], [0], [1], [0, 0, 1, 1], [], []>} : vector<8x32xf32>, vector<32x32xf32>, vector<8x32xf32> -> vector<8x32xf32>
    %255 = arith.addf %253, %254 : vector<8x32xf32>
    %256 = arith.negf %255 : vector<8x32xf32>
    %257 = math.exp %256 : vector<8x32xf32>
    %cst_92 = arith.constant 1.000000e+00 : f32
    %258 = vector.broadcast %cst_92 : f32 to vector<8x32xf32>
    %259 = arith.addf %258, %257 : vector<8x32xf32>
    %260 = arith.divf %258, %259 : vector<8x32xf32>
    %261 = arith.index_cast %c5_i32 : i32 to index
    %c0_93 = arith.constant 0 : index
    %c0_94 = arith.constant 0 : index
    %262 = vector.load %arg4[%261, %c0_93, %c0_94] : memref<8x8x32xf32, #tpu.memory_space<vmem>>, vector<1x8x32xf32>
    %263 = vector.shape_cast %262 : vector<1x8x32xf32> to vector<8x32xf32>
    %cst_95 = arith.constant dense<0.000000e+00> : vector<8x32xf32>
    %264 = tpu.matmul %232, %3, %cst_95 {dimension_numbers = #tpu.dot_dimension_numbers<[1], [0], [0], [1], [0, 0, 1, 1], [], []>} : vector<8x32xf32>, vector<32x32xf32>, vector<8x32xf32> -> vector<8x32xf32>
    %265 = vector.broadcast %4 : vector<1x32xf32> to vector<8x32xf32>
    %266 = arith.addf %264, %265 : vector<8x32xf32>
    %267 = arith.mulf %250, %266 : vector<8x32xf32>
    %268 = arith.addf %263, %267 : vector<8x32xf32>
    %269 = math.tanh %268 : vector<8x32xf32>
    %cst_96 = arith.constant 1.000000e+00 : f32
    %270 = vector.broadcast %cst_96 : f32 to vector<8x32xf32>
    %271 = arith.subf %270, %260 : vector<8x32xf32>
    %272 = arith.mulf %271, %269 : vector<8x32xf32>
    %273 = arith.mulf %260, %232 : vector<8x32xf32>
    %274 = arith.addf %272, %273 : vector<8x32xf32>
    %275 = vector.broadcast %c5_i32 : i32 to vector<8x1xi32>
    %276 = arith.cmpi slt, %275, %0 : vector<8x1xi32>
    %277 = vector.shape_cast %276 : vector<8x1xi1> to vector<8x1xi1>
    %278 = vector.broadcast %277 : vector<8x1xi1> to vector<8x32xi1>
    %279 = arith.select %278, %274, %232 : vector<8x32xi1>, vector<8x32xf32>
    %cst_97 = arith.constant 0.000000e+00 : f32
    %280 = vector.shape_cast %276 : vector<8x1xi1> to vector<8x1xi1>
    %281 = vector.broadcast %280 : vector<8x1xi1> to vector<8x32xi1>
    %282 = vector.broadcast %cst_97 : f32 to vector<8x32xf32>
    %283 = arith.select %281, %279, %282 : vector<8x32xi1>, vector<8x32xf32>
    %284 = arith.index_cast %c5_i32 : i32 to index
    %c0_98 = arith.constant 0 : index
    %c0_99 = arith.constant 0 : index
    %285 = vector.load %arg10[%284, %c0_98, %c0_99] : memref<8x8x32xf32, #tpu.memory_space<vmem>>, vector<1x8x32xf32>
    %286 = vector.shape_cast %285 : vector<1x8x32xf32> to vector<8x32xf32>
    %287 = vector.shape_cast %283 : vector<8x32xf32> to vector<1x8x32xf32>
    tpu.vector_store %arg10[%284, %c0_98, %c0_99], %287 {strides = array<i32>} : memref<8x8x32xf32, #tpu.memory_space<vmem>>, vector<1x8x32xf32>,
    %c6_i32 = arith.constant 6 : i32
    %288 = arith.index_cast %c6_i32 : i32 to index
    %c0_100 = arith.constant 0 : index
    %c0_101 = arith.constant 0 : index
    %289 = vector.load %arg2[%288, %c0_100, %c0_101] : memref<8x8x32xf32, #tpu.memory_space<vmem>>, vector<1x8x32xf32>
    %290 = vector.shape_cast %289 : vector<1x8x32xf32> to vector<8x32xf32>
    %cst_102 = arith.constant dense<0.000000e+00> : vector<8x32xf32>
    %291 = tpu.matmul %279, %1, %cst_102 {dimension_numbers = #tpu.dot_dimension_numbers<[1], [0], [0], [1], [0, 0, 1, 1], [], []>} : vector<8x32xf32>, vector<32x32xf32>, vector<8x32xf32> -> vector<8x32xf32>
    %292 = arith.addf %290, %291 : vector<8x32xf32>
    %293 = arith.negf %292 : vector<8x32xf32>
    %294 = math.exp %293 : vector<8x32xf32>
    %cst_103 = arith.constant 1.000000e+00 : f32
    %295 = vector.broadcast %cst_103 : f32 to vector<8x32xf32>
    %296 = arith.addf %295, %294 : vector<8x32xf32>
    %297 = arith.divf %295, %296 : vector<8x32xf32>
    %298 = arith.index_cast %c6_i32 : i32 to index
    %c0_104 = arith.constant 0 : index
    %c0_105 = arith.constant 0 : index
    %299 = vector.load %arg3[%298, %c0_104, %c0_105] : memref<8x8x32xf32, #tpu.memory_space<vmem>>, vector<1x8x32xf32>
    %300 = vector.shape_cast %299 : vector<1x8x32xf32> to vector<8x32xf32>
    %cst_106 = arith.constant dense<0.000000e+00> : vector<8x32xf32>
    %301 = tpu.matmul %279, %2, %cst_106 {dimension_numbers = #tpu.dot_dimension_numbers<[1], [0], [0], [1], [0, 0, 1, 1], [], []>} : vector<8x32xf32>, vector<32x32xf32>, vector<8x32xf32> -> vector<8x32xf32>
    %302 = arith.addf %300, %301 : vector<8x32xf32>
    %303 = arith.negf %302 : vector<8x32xf32>
    %304 = math.exp %303 : vector<8x32xf32>
    %cst_107 = arith.constant 1.000000e+00 : f32
    %305 = vector.broadcast %cst_107 : f32 to vector<8x32xf32>
    %306 = arith.addf %305, %304 : vector<8x32xf32>
    %307 = arith.divf %305, %306 : vector<8x32xf32>
    %308 = arith.index_cast %c6_i32 : i32 to index
    %c0_108 = arith.constant 0 : index
    %c0_109 = arith.constant 0 : index
    %309 = vector.load %arg4[%308, %c0_108, %c0_109] : memref<8x8x32xf32, #tpu.memory_space<vmem>>, vector<1x8x32xf32>
    %310 = vector.shape_cast %309 : vector<1x8x32xf32> to vector<8x32xf32>
    %cst_110 = arith.constant dense<0.000000e+00> : vector<8x32xf32>
    %311 = tpu.matmul %279, %3, %cst_110 {dimension_numbers = #tpu.dot_dimension_numbers<[1], [0], [0], [1], [0, 0, 1, 1], [], []>} : vector<8x32xf32>, vector<32x32xf32>, vector<8x32xf32> -> vector<8x32xf32>
    %312 = vector.broadcast %4 : vector<1x32xf32> to vector<8x32xf32>
    %313 = arith.addf %311, %312 : vector<8x32xf32>
    %314 = arith.mulf %297, %313 : vector<8x32xf32>
    %315 = arith.addf %310, %314 : vector<8x32xf32>
    %316 = math.tanh %315 : vector<8x32xf32>
    %cst_111 = arith.constant 1.000000e+00 : f32
    %317 = vector.broadcast %cst_111 : f32 to vector<8x32xf32>
    %318 = arith.subf %317, %307 : vector<8x32xf32>
    %319 = arith.mulf %318, %316 : vector<8x32xf32>
    %320 = arith.mulf %307, %279 : vector<8x32xf32>
    %321 = arith.addf %319, %320 : vector<8x32xf32>
    %322 = vector.broadcast %c6_i32 : i32 to vector<8x1xi32>
    %323 = arith.cmpi slt, %322, %0 : vector<8x1xi32>
    %324 = vector.shape_cast %323 : vector<8x1xi1> to vector<8x1xi1>
    %325 = vector.broadcast %324 : vector<8x1xi1> to vector<8x32xi1>
    %326 = arith.select %325, %321, %279 : vector<8x32xi1>, vector<8x32xf32>
    %cst_112 = arith.constant 0.000000e+00 : f32
    %327 = vector.shape_cast %323 : vector<8x1xi1> to vector<8x1xi1>
    %328 = vector.broadcast %327 : vector<8x1xi1> to vector<8x32xi1>
    %329 = vector.broadcast %cst_112 : f32 to vector<8x32xf32>
    %330 = arith.select %328, %326, %329 : vector<8x32xi1>, vector<8x32xf32>
    %331 = arith.index_cast %c6_i32 : i32 to index
    %c0_113 = arith.constant 0 : index
    %c0_114 = arith.constant 0 : index
    %332 = vector.load %arg10[%331, %c0_113, %c0_114] : memref<8x8x32xf32, #tpu.memory_space<vmem>>, vector<1x8x32xf32>
    %333 = vector.shape_cast %332 : vector<1x8x32xf32> to vector<8x32xf32>
    %334 = vector.shape_cast %330 : vector<8x32xf32> to vector<1x8x32xf32>
    tpu.vector_store %arg10[%331, %c0_113, %c0_114], %334 {strides = array<i32>} : memref<8x8x32xf32, #tpu.memory_space<vmem>>, vector<1x8x32xf32>,
    %c7_i32 = arith.constant 7 : i32
    %335 = arith.index_cast %c7_i32 : i32 to index
    %c0_115 = arith.constant 0 : index
    %c0_116 = arith.constant 0 : index
    %336 = vector.load %arg2[%335, %c0_115, %c0_116] : memref<8x8x32xf32, #tpu.memory_space<vmem>>, vector<1x8x32xf32>
    %337 = vector.shape_cast %336 : vector<1x8x32xf32> to vector<8x32xf32>
    %cst_117 = arith.constant dense<0.000000e+00> : vector<8x32xf32>
    %338 = tpu.matmul %326, %1, %cst_117 {dimension_numbers = #tpu.dot_dimension_numbers<[1], [0], [0], [1], [0, 0, 1, 1], [], []>} : vector<8x32xf32>, vector<32x32xf32>, vector<8x32xf32> -> vector<8x32xf32>
    %339 = arith.addf %337, %338 : vector<8x32xf32>
    %340 = arith.negf %339 : vector<8x32xf32>
    %341 = math.exp %340 : vector<8x32xf32>
    %cst_118 = arith.constant 1.000000e+00 : f32
    %342 = vector.broadcast %cst_118 : f32 to vector<8x32xf32>
    %343 = arith.addf %342, %341 : vector<8x32xf32>
    %344 = arith.divf %342, %343 : vector<8x32xf32>
    %345 = arith.index_cast %c7_i32 : i32 to index
    %c0_119 = arith.constant 0 : index
    %c0_120 = arith.constant 0 : index
    %346 = vector.load %arg3[%345, %c0_119, %c0_120] : memref<8x8x32xf32, #tpu.memory_space<vmem>>, vector<1x8x32xf32>
    %347 = vector.shape_cast %346 : vector<1x8x32xf32> to vector<8x32xf32>
    %cst_121 = arith.constant dense<0.000000e+00> : vector<8x32xf32>
    %348 = tpu.matmul %326, %2, %cst_121 {dimension_numbers = #tpu.dot_dimension_numbers<[1], [0], [0], [1], [0, 0, 1, 1], [], []>} : vector<8x32xf32>, vector<32x32xf32>, vector<8x32xf32> -> vector<8x32xf32>
    %349 = arith.addf %347, %348 : vector<8x32xf32>
    %350 = arith.negf %349 : vector<8x32xf32>
    %351 = math.exp %350 : vector<8x32xf32>
    %cst_122 = arith.constant 1.000000e+00 : f32
    %352 = vector.broadcast %cst_122 : f32 to vector<8x32xf32>
    %353 = arith.addf %352, %351 : vector<8x32xf32>
    %354 = arith.divf %352, %353 : vector<8x32xf32>
    %355 = arith.index_cast %c7_i32 : i32 to index
    %c0_123 = arith.constant 0 : index
    %c0_124 = arith.constant 0 : index
    %356 = vector.load %arg4[%355, %c0_123, %c0_124] : memref<8x8x32xf32, #tpu.memory_space<vmem>>, vector<1x8x32xf32>
    %357 = vector.shape_cast %356 : vector<1x8x32xf32> to vector<8x32xf32>
    %cst_125 = arith.constant dense<0.000000e+00> : vector<8x32xf32>
    %358 = tpu.matmul %326, %3, %cst_125 {dimension_numbers = #tpu.dot_dimension_numbers<[1], [0], [0], [1], [0, 0, 1, 1], [], []>} : vector<8x32xf32>, vector<32x32xf32>, vector<8x32xf32> -> vector<8x32xf32>
    %359 = vector.broadcast %4 : vector<1x32xf32> to vector<8x32xf32>
    %360 = arith.addf %358, %359 : vector<8x32xf32>
    %361 = arith.mulf %344, %360 : vector<8x32xf32>
    %362 = arith.addf %357, %361 : vector<8x32xf32>
    %363 = math.tanh %362 : vector<8x32xf32>
    %cst_126 = arith.constant 1.000000e+00 : f32
    %364 = vector.broadcast %cst_126 : f32 to vector<8x32xf32>
    %365 = arith.subf %364, %354 : vector<8x32xf32>
    %366 = arith.mulf %365, %363 : vector<8x32xf32>
    %367 = arith.mulf %354, %326 : vector<8x32xf32>
    %368 = arith.addf %366, %367 : vector<8x32xf32>
    %369 = vector.broadcast %c7_i32 : i32 to vector<8x1xi32>
    %370 = arith.cmpi slt, %369, %0 : vector<8x1xi32>
    %371 = vector.shape_cast %370 : vector<8x1xi1> to vector<8x1xi1>
    %372 = vector.broadcast %371 : vector<8x1xi1> to vector<8x32xi1>
    %373 = arith.select %372, %368, %326 : vector<8x32xi1>, vector<8x32xf32>
    %cst_127 = arith.constant 0.000000e+00 : f32
    %374 = vector.shape_cast %370 : vector<8x1xi1> to vector<8x1xi1>
    %375 = vector.broadcast %374 : vector<8x1xi1> to vector<8x32xi1>
    %376 = vector.broadcast %cst_127 : f32 to vector<8x32xf32>
    %377 = arith.select %375, %373, %376 : vector<8x32xi1>, vector<8x32xf32>
    %378 = arith.index_cast %c7_i32 : i32 to index
    %c0_128 = arith.constant 0 : index
    %c0_129 = arith.constant 0 : index
    %379 = vector.load %arg10[%378, %c0_128, %c0_129] : memref<8x8x32xf32, #tpu.memory_space<vmem>>, vector<1x8x32xf32>
    %380 = vector.shape_cast %379 : vector<1x8x32xf32> to vector<8x32xf32>
    %381 = vector.shape_cast %377 : vector<8x32xf32> to vector<1x8x32xf32>
    tpu.vector_store %arg10[%378, %c0_128, %c0_129], %381 {strides = array<i32>} : memref<8x8x32xf32, #tpu.memory_space<vmem>>, vector<1x8x32xf32>,
    %c8_i32 = arith.constant 8 : i32
    %c0_130 = arith.constant 0 : index
    %c0_131 = arith.constant 0 : index
    %382 = vector.load %arg11[%c0_130, %c0_131] : memref<8x32xf32, #tpu.memory_space<vmem>>, vector<8x32xf32>
    tpu.vector_store %arg11[%c0_130, %c0_131], %373 {strides = array<i32>} : memref<8x32xf32, #tpu.memory_space<vmem>>, vector<8x32xf32>,
    return
  }
  func.func @transform_0(%arg0: i32) -> (i32, i32) {
    %c0_i32 = arith.constant 0 : i32
    %c0_i32_0 = arith.constant 0 : i32
    %c0_i32_1 = arith.constant 0 : i32
    return %c0_i32, %c0_i32_0 : i32, i32
  }
  func.func @transform_1(%arg0: i32) -> (i32, i32, i32) {
    %c0_i32 = arith.constant 0 : i32
    %c0_i32_0 = arith.constant 0 : i32
    %c0_i32_1 = arith.constant 0 : i32
    %c0_i32_2 = arith.constant 0 : i32
    return %c0_i32, %c0_i32_0, %c0_i32_1 : i32, i32, i32
  }
  func.func @transform_2(%arg0: i32) -> (i32, i32, i32) {
    %c0_i32 = arith.constant 0 : i32
    %c0_i32_0 = arith.constant 0 : i32
    %c0_i32_1 = arith.constant 0 : i32
    %c0_i32_2 = arith.constant 0 : i32
    return %c0_i32, %c0_i32_0, %c0_i32_1 : i32, i32, i32
  }
  func.func @transform_3(%arg0: i32) -> (i32, i32, i32) {
    %c0_i32 = arith.constant 0 : i32
    %c0_i32_0 = arith.constant 0 : i32
    %c0_i32_1 = arith.constant 0 : i32
    %c0_i32_2 = arith.constant 0 : i32
    return %c0_i32, %c0_i32_0, %c0_i32_1 : i32, i32, i32
  }
  func.func @transform_4(%arg0: i32) -> (i32, i32) {
    %c0_i32 = arith.constant 0 : i32
    %c0_i32_0 = arith.constant 0 : i32
    %c0_i32_1 = arith.constant 0 : i32
    return %c0_i32, %c0_i32_0 : i32, i32
  }
  func.func @transform_5(%arg0: i32) -> (i32, i32) {
    %c0_i32 = arith.constant 0 : i32
    %c0_i32_0 = arith.constant 0 : i32
    %c0_i32_1 = arith.constant 0 : i32
    return %c0_i32, %c0_i32_0 : i32, i32
  }
  func.func @transform_6(%arg0: i32) -> (i32, i32) {
    %c0_i32 = arith.constant 0 : i32
    %c0_i32_0 = arith.constant 0 : i32
    %c0_i32_1 = arith.constant 0 : i32
    return %c0_i32, %c0_i32_0 : i32, i32
  }
  func.func @transform_7(%arg0: i32) -> (i32, i32) {
    %c0_i32 = arith.constant 0 : i32
    %c0_i32_0 = arith.constant 0 : i32
    %c0_i32_1 = arith.constant 0 : i32
    return %c0_i32, %c0_i32_0 : i32, i32
  }
  func.func @transform_8(%arg0: i32) -> (i32, i32) {
    %c0_i32 = arith.constant 0 : i32
    %c0_i32_0 = arith.constant 0 : i32
    %c0_i32_1 = arith.constant 0 : i32
    return %c0_i32, %c0_i32_0 : i32, i32
  }
  func.func @transform_9(%arg0: i32) -> (i32, i32, i32) {
    %c0_i32 = arith.constant 0 : i32
    %c0_i32_0 = arith.constant 0 : i32
    %c0_i32_1 = arith.constant 0 : i32
    %c0_i32_2 = arith.constant 0 : i32
    return %c0_i32, %c0_i32_0, %c0_i32_1 : i32, i32, i32
  }
  func.func @transform_10(%arg0: i32) -> (i32, i32) {
    %c0_i32 = arith.constant 0 : i32
    %c0_i32_0 = arith.constant 0 : i32
    %c0_i32_1 = arith.constant 0 : i32
    return %c0_i32, %c0_i32_0 : i32, i32
  }
}

</mosaic_0001>

<llo_original>
// kernel: tpu_custom_call.1
$region0: #{tpu_custom_call.1}
  #allocation0 [shape = 'u32[]', space=smem, size = 0x4, offset = 0x4, fixed_abs, tag = 'smem constant byte address 0x4 - core index']
  #allocation1 [shape = 'u32[72,128]{1,0:T(1,128)}', space=vmem, size = 0x9000, scoped, tag = 'internal scratch']
  %s0 = inlined_call_operand.vmem [shape: s32[8,1], index: 0, kind: input, shape index: {}]
  %s1 = inlined_call_operand.hbm [shape: f32[8,8,32], index: 1, kind: input, shape index: {}]
  %s2 = inlined_call_operand.hbm [shape: f32[8,8,32], index: 2, kind: input, shape index: {}]
  %s3 = inlined_call_operand.hbm [shape: f32[8,8,32], index: 3, kind: input, shape index: {}]
  %s4 = inlined_call_operand.hbm [shape: f32[32,32], index: 4, kind: input, shape index: {}]
  %s5 = inlined_call_operand.hbm [shape: f32[32,32], index: 5, kind: input, shape index: {}]
  %s6 = inlined_call_operand.hbm [shape: f32[32,32], index: 6, kind: input, shape index: {}]
  %s7 = inlined_call_operand.vmem [shape: f32[1,32], index: 7, kind: input, shape index: {}]
  %s8 = inlined_call_operand.vmem [shape: f32[8,32], index: 8, kind: input, shape index: {}]
  %s9 = inlined_call_operand.hbm [shape: f32[8,8,32], index: 9, kind: output, shape index: {0}]
  %s10 = inlined_call_operand.hbm [shape: f32[8,32], index: 10, kind: output, shape index: {1}]
  %11 = xla_tuple %s9, %s10
  %s12 = sld [smem:[#allocation0]]
  $region78: #{tpu_custom_call.1} parent=0
    _
  %s14 = ssub.s32 1, %s12
  %s15 = scalar_select 0, %s14, %s12
  $region1: #{tpu_custom_call.1} parent=0
    #allocation2 [shape = 'u8[32768]{0}', space=vmem, size = 0x8000, scoped, tag = 'input window, operand 1, single buffered']
    #allocation3 [shape = 's32[1]{0}', space=sflag, size = 0x4, scoped, tag = 'scoped memory for tpu_custom_call.1']
    #allocation4 [shape = 's32[1]{0}', space=sflag, size = 0x4, scoped, tag = 'scoped memory for tpu_custom_call.1']
    #allocation5 [shape = 'u8[32768]{0}', space=vmem, size = 0x8000, scoped, tag = 'input window, operand 2, single buffered']
    #allocation6 [shape = 's32[1]{0}', space=sflag, size = 0x4, scoped, tag = 'scoped memory for tpu_custom_call.1']
    #allocation7 [shape = 'u8[32768]{0}', space=vmem, size = 0x8000, scoped, tag = 'input window, operand 3, single buffered']
    #allocation8 [shape = 'u8[16384]{0}', space=vmem, size = 0x4000, scoped, tag = 'input window, operand 4, single buffered']
    #allocation9 [shape = 's32[1]{0}', space=sflag, size = 0x4, scoped, tag = 'scoped memory for tpu_custom_call.1']
    #allocation10 [shape = 'u8[16384]{0}', space=vmem, size = 0x4000, scoped, tag = 'input window, operand 5, single buffered']
    #allocation11 [shape = 'u8[16384]{0}', space=vmem, size = 0x4000, scoped, tag = 'input window, operand 6, single buffered']
    #allocation12 [shape = 's32[1]{0}', space=sflag, size = 0x4, scoped, tag = 'scoped memory for tpu_custom_call.1']
    #allocation13 [shape = 'u8[32768]{0}', space=vmem, size = 0x8000, scoped, tag = 'output window, operand 0, single buffered']
    #allocation14 [shape = 'u8[4096]{0}', space=vmem, size = 0x1000, scoped, tag = 'output window, operand 1, single buffered']
    #allocation15 [shape = 's32[1]{0}', space=sflag, size = 0x4, scoped, tag = 'scoped memory for tpu_custom_call.1']
    %16 = vsyncpa [#allocation3], 0
    %17 = vsyncpa [#allocation6], 0
    %18 = vsyncpa [#allocation9], 0
    %19 = vsyncpa [#allocation12], 0
    %20 = vsyncpa [#allocation4], 0
    %21 = vsyncpa [#allocation15], 0
    // Predicated region
    $region2: #{tpu_custom_call.1} parent=1 // pred_check
      _
    $region3: #{tpu_custom_call.1} parent=1 // pred_check_branch
      %23 = sbr.rel (0) target = $region5
    $region4: #{tpu_custom_call.1} parent=1 // pred_region
      _
    $region5: #{tpu_custom_call.1} parent=1 // pred_fallthru
      _
    // Predicated region
    $region6: #{tpu_custom_call.1} parent=1 // pred_check
      _
    $region7: #{tpu_custom_call.1} parent=1 // pred_check_branch
      %25 = sbr.rel (0) target = $region9
    $region8: #{tpu_custom_call.1} parent=1 // pred_region
      %27 = vsyncadd [#allocation3], 0
      %s28 = sshll.u32 %s1, 4
      %s29 = int_to_ptr.hbm [resolvable:$true] %s28
      %s30 = sshll.u32 [#allocation2], 4
      %s31 = int_to_ptr.vmem [resolvable:$true] %s30
      %36 = dma.hbm_to_vmem [thread:$0]  %s29, 1024, %s31, [#allocation3], 128, 128, 8
    $region9: #{tpu_custom_call.1} parent=1 // pred_fallthru
      _
    // Predicated region
    $region10: #{tpu_custom_call.1} parent=1 // pred_check
      _
    $region11: #{tpu_custom_call.1} parent=1 // pred_check_branch
      %38 = sbr.rel (0) target = $region13
    $region12: #{tpu_custom_call.1} parent=1 // pred_region
      %40 = vsyncadd [#allocation6], 0
      %s41 = sshll.u32 %s2, 4
      %s42 = int_to_ptr.hbm [resolvable:$true] %s41
      %s43 = sshll.u32 [#allocation5], 4
      %s44 = int_to_ptr.vmem [resolvable:$true] %s43
      %49 = dma.hbm_to_vmem [thread:$0]  %s42, 1024, %s44, [#allocation6], 128, 128, 8
    $region13: #{tpu_custom_call.1} parent=1 // pred_fallthru
      _
    // Predicated region
    $region14: #{tpu_custom_call.1} parent=1 // pred_check
      _
    $region15: #{tpu_custom_call.1} parent=1 // pred_check_branch
      %51 = sbr.rel (0) target = $region17
    $region16: #{tpu_custom_call.1} parent=1 // pred_region
      %53 = vsyncadd [#allocation6], 0
      %s54 = sshll.u32 %s3, 4
      %s55 = int_to_ptr.hbm [resolvable:$true] %s54
      %s56 = sshll.u32 [#allocation7], 4
      %s57 = int_to_ptr.vmem [resolvable:$true] %s56
      %62 = dma.hbm_to_vmem [thread:$0]  %s55, 1024, %s57, [#allocation6], 128, 128, 8
    $region17: #{tpu_custom_call.1} parent=1 // pred_fallthru
      _
    // Predicated region
    $region18: #{tpu_custom_call.1} parent=1 // pred_check
      _
    $region19: #{tpu_custom_call.1} parent=1 // pred_check_branch
      %64 = sbr.rel (0) target = $region21
    $region20: #{tpu_custom_call.1} parent=1 // pred_region
      %66 = vsyncadd [#allocation9], 0
      %s67 = sshll.u32 %s4, 4
      %s68 = int_to_ptr.hbm [resolvable:$true] %s67
      %s69 = sshll.u32 [#allocation8], 4
      %s70 = int_to_ptr.vmem [resolvable:$true] %s69
      %75 = dma.hbm_to_vmem [thread:$0]  %s68, 512, %s70, [#allocation9], 128, 128, 8
    $region21: #{tpu_custom_call.1} parent=1 // pred_fallthru
      _
    // Predicated region
    $region22: #{tpu_custom_call.1} parent=1 // pred_check
      _
    $region23: #{tpu_custom_call.1} parent=1 // pred_check_branch
      %77 = sbr.rel (0) target = $region25
    $region24: #{tpu_custom_call.1} parent=1 // pred_region
      %79 = vsyncadd [#allocation9], 0
      %s80 = sshll.u32 %s5, 4
      %s81 = int_to_ptr.hbm [resolvable:$true] %s80
      %s82 = sshll.u32 [#allocation10], 4
      %s83 = int_to_ptr.vmem [resolvable:$true] %s82
      %88 = dma.hbm_to_vmem [thread:$0]  %s81, 512, %s83, [#allocation9], 128, 128, 8
    $region25: #{tpu_custom_call.1} parent=1 // pred_fallthru
      _
    // Predicated region
    $region26: #{tpu_custom_call.1} parent=1 // pred_check
      _
    $region27: #{tpu_custom_call.1} parent=1 // pred_check_branch
      %90 = sbr.rel (0) target = $region29
    $region28: #{tpu_custom_call.1} parent=1 // pred_region
      %92 = vsyncadd [#allocation12], 0
      %s93 = sshll.u32 %s6, 4
      %s94 = int_to_ptr.hbm [resolvable:$true] %s93
      %s95 = sshll.u32 [#allocation11], 4
      %s96 = int_to_ptr.vmem [resolvable:$true] %s95
      %101 = dma.hbm_to_vmem [thread:$0]  %s94, 512, %s96, [#allocation12], 128, 128, 8
    $region29: #{tpu_custom_call.1} parent=1 // pred_fallthru
      _
    // Predicated region
    $region30: #{tpu_custom_call.1} parent=1 // pred_check
      _
    $region31: #{tpu_custom_call.1} parent=1 // pred_check_branch
      %103 = sbr.rel (0) target = $region33
    $region32: #{tpu_custom_call.1} parent=1 // pred_region
      _
    $region33: #{tpu_custom_call.1} parent=1 // pred_fallthru
      _
    // Predicated region
    $region34: #{tpu_custom_call.1} parent=1 // pred_check
      _
    $region35: #{tpu_custom_call.1} parent=1 // pred_check_branch
      %105 = sbr.rel (0) target = $region37
    $region36: #{tpu_custom_call.1} parent=1 // pred_region
      _
    $region37: #{tpu_custom_call.1} parent=1 // pred_fallthru
      _
    // Predicated region
    $region38: #{tpu_custom_call.1} parent=1 // pred_check
      _
    $region39: #{tpu_custom_call.1} parent=1 // pred_check_branch
      %107 = sbr.rel (0) target = $region41
    $region40: #{tpu_custom_call.1} parent=1 // pred_region
      %109 = dma.done [#allocation3], 1024
    $region41: #{tpu_custom_call.1} parent=1 // pred_fallthru
      _
    // Predicated region
    $region42: #{tpu_custom_call.1} parent=1 // pred_check
      _
    $region43: #{tpu_custom_call.1} parent=1 // pred_check_branch
      %111 = sbr.rel (0) target = $region45
    $region44: #{tpu_custom_call.1} parent=1 // pred_region
      %113 = dma.done [#allocation6], 1024
    $region45: #{tpu_custom_call.1} parent=1 // pred_fallthru
      _
    // Predicated region
    $region46: #{tpu_custom_call.1} parent=1 // pred_check
      _
    $region47: #{tpu_custom_call.1} parent=1 // pred_check_branch
      %115 = sbr.rel (0) target = $region49
    $region48: #{tpu_custom_call.1} parent=1 // pred_region
      %117 = dma.done [#allocation6], 1024
    $region49: #{tpu_custom_call.1} parent=1 // pred_fallthru
      _
    // Predicated region
    $region50: #{tpu_custom_call.1} parent=1 // pred_check
      _
    $region51: #{tpu_custom_call.1} parent=1 // pred_check_branch
      %119 = sbr.rel (0) target = $region53
    $region52: #{tpu_custom_call.1} parent=1 // pred_region
      %121 = dma.done [#allocation9], 512
    $region53: #{tpu_custom_call.1} parent=1 // pred_fallthru
      _
    // Predicated region
    $region54: #{tpu_custom_call.1} parent=1 // pred_check
      _
    $region55: #{tpu_custom_call.1} parent=1 // pred_check_branch
      %123 = sbr.rel (0) target = $region57
    $region56: #{tpu_custom_call.1} parent=1 // pred_region
      %125 = dma.done [#allocation9], 512
    $region57: #{tpu_custom_call.1} parent=1 // pred_fallthru
      _
    // Predicated region
    $region58: #{tpu_custom_call.1} parent=1 // pred_check
      _
    $region59: #{tpu_custom_call.1} parent=1 // pred_check_branch
      %127 = sbr.rel (0) target = $region61
    $region60: #{tpu_custom_call.1} parent=1 // pred_region
      %129 = dma.done [#allocation12], 512
    $region61: #{tpu_custom_call.1} parent=1 // pred_fallthru
      _
    %v130 = vld [vmem:[%s0] sm:$0xff]
    %v131 = vld [vmem:[#allocation8] sm:$0xff]
    %v132 = vld [vmem:[#allocation8 + $0x8] sm:$0xff]
    %v133 = vld [vmem:[#allocation8 + $0x10] sm:$0xff]
    %v134 = vld [vmem:[#allocation8 + $0x18] sm:$0xff]
    %v135 = vld [vmem:[#allocation10] sm:$0xff]
    %v136 = vld [vmem:[#allocation10 + $0x8] sm:$0xff]
    %v137 = vld [vmem:[#allocation10 + $0x10] sm:$0xff]
    %v138 = vld [vmem:[#allocation10 + $0x18] sm:$0xff]
    %v139 = vld [vmem:[#allocation11] sm:$0xff]
    %v140 = vld [vmem:[#allocation11 + $0x8] sm:$0xff]
    %v141 = vld [vmem:[#allocation11 + $0x10] sm:$0xff]
    %v142 = vld [vmem:[#allocation11 + $0x18] sm:$0xff]
    %v143 = vld [vmem:[%s7] sm:$0x1]
    %v144 = vld [vmem:[%s8] sm:$0xff]
    %v145 = vld [vmem:[#allocation2] sm:$0xff]
    %vm146 = vcmask 261120
    %v148 = vsel %vm146, %v144, 0
    %150 = vmatpush.msra.mxu0 0.0
    %151 = vmatpush.msra.mxu0 0.0
    %152 = vmatpush.msra.mxu0 0.0
    %153 = vmatpush.msra.mxu0 0.0
    %154 = vmatpush.msra.mxu0 0.0
    %155 = vmatpush.msra.mxu0 0.0
    %156 = vmatpush.msra.mxu0 0.0
    %157 = vmatpush.msra.mxu0 0.0
    %158 = vmatpush.msra.mxu0 0.0
    %159 = vmatpush.msra.mxu0 0.0
    %160 = vmatpush.msra.mxu0 0.0
    %161 = vmatpush.msra.mxu0 0.0
    %162 = vmatpush.msra.mxu0 %v134
    %163 = vmatpush.msra.mxu0 %v133
    %164 = vmatpush.msra.mxu0 %v132
    %165 = vmatpush.msra.mxu0 %v131
    %166 = vmatmul.f32.gmra.mxu0 %v148
    %v167 = vpop.f32.mrf.mxu0
    %v168 = vadd.f32 0.0, %v167
    %169 = vdwg.mxu0
    %v170 = vadd.f32 %v145, %v168
    %v171 = vxor.u32 %v170, 2147483648
    %v172 = vmul.f32 %v171, 1.442695
    %v173 = vpow.pop %v172
    %v174 = vadd.f32 %v173, 1.0
    %v175 = vrcp.pop %v174
    %v176 = vmul.f32 %v174, %v175
    %v177 = vsub.f32 1.0, %v176
    %v178 = vmul.f32 %v175, %v177
    %v179 = vadd.f32 %v175, %v178
    %vm180 = vweird.f32 %v174
    %vm181 = vweird.f32 %v175
    %vm182 = vmor %vm180, %vm181
    %v183 = vsel %vm182, %v175, %v179
    %v184 = vand.u32 2147483647, %v174
    %vm185 = vcmp.eq.f32.partialorder %v184, 8.507059e+37
    %v186 = vand.u32 %v174, 2147483648
    %v187 = vor.u32 1.1754944e-38, %v186
    %v188 = vsel %vm185, %v187, %v183
    %v189 = vmul.f32 1.0, %v188
    %v190 = vld [vmem:[#allocation5] sm:$0xff]
    %191 = vmatpush.msra.mxu0 0.0
    %192 = vmatpush.msra.mxu0 0.0
    %193 = vmatpush.msra.mxu0 0.0
    %194 = vmatpush.msra.mxu0 0.0
    %195 = vmatpush.msra.mxu0 0.0
    %196 = vmatpush.msra.mxu0 0.0
    %197 = vmatpush.msra.mxu0 0.0
    %198 = vmatpush.msra.mxu0 0.0
    %199 = vmatpush.msra.mxu0 0.0
    %200 = vmatpush.msra.mxu0 0.0
    %201 = vmatpush.msra.mxu0 0.0
    %202 = vmatpush.msra.mxu0 0.0
    %203 = vmatpush.msra.mxu0 %v138
    %204 = vmatpush.msra.mxu0 %v137
    %205 = vmatpush.msra.mxu0 %v136
    %206 = vmatpush.msra.mxu0 %v135
    %207 = vmatmul.f32.gmra.mxu0 %v148
    %v208 = vpop.f32.mrf.mxu0
    %v209 = vadd.f32 0.0, %v208
    %210 = vdwg.mxu0
    %v211 = vadd.f32 %v190, %v209
    %v212 = vxor.u32 %v211, 2147483648
    %v213 = vmul.f32 %v212, 1.442695
    %v214 = vpow.pop %v213
    %v215 = vadd.f32 %v214, 1.0
    %v216 = vrcp.pop %v215
    %v217 = vmul.f32 %v215, %v216
    %v218 = vsub.f32 1.0, %v217
    %v219 = vmul.f32 %v216, %v218
    %v220 = vadd.f32 %v216, %v219
    %vm221 = vweird.f32 %v215
    %vm222 = vweird.f32 %v216
    %vm223 = vmor %vm221, %vm222
    %v224 = vsel %vm223, %v216, %v220
    %v225 = vand.u32 2147483647, %v215
    %vm226 = vcmp.eq.f32.partialorder %v225, 8.507059e+37
    %v227 = vand.u32 %v215, 2147483648
    %v228 = vor.u32 1.1754944e-38, %v227
    %v229 = vsel %vm226, %v228, %v224
    %v230 = vmul.f32 1.0, %v229
    %v231 = vld [vmem:[#allocation7] sm:$0xff]
    %v233 = vperm.slane %v143, 0
    %235 = vmatpush.msra.mxu0 0.0
    %236 = vmatpush.msra.mxu0 0.0
    %237 = vmatpush.msra.mxu0 0.0
    %238 = vmatpush.msra.mxu0 0.0
    %239 = vmatpush.msra.mxu0 0.0
    %240 = vmatpush.msra.mxu0 0.0
    %241 = vmatpush.msra.mxu0 0.0
    %242 = vmatpush.msra.mxu0 0.0
    %243 = vmatpush.msra.mxu0 0.0
    %244 = vmatpush.msra.mxu0 0.0
    %245 = vmatpush.msra.mxu0 0.0
    %246 = vmatpush.msra.mxu0 0.0
    %247 = vmatpush.msra.mxu0 %v142
    %248 = vmatpush.msra.mxu0 %v141
    %249 = vmatpush.msra.mxu0 %v140
    %250 = vmatpush.msra.mxu0 %v139
    %251 = vmatmul.f32.gmra.mxu0 %v148
    %v252 = vpop.f32.mrf.mxu0
    %v253 = vadd.f32 %v233, %v252
    %254 = vdwg.mxu0
    %v255 = vmul.f32 %v189, %v253
    %v256 = vadd.f32 %v231, %v255
    %v257 = vtanh.pop %v256
    %v258 = vsub.f32 1.0, %v230
    %v259 = vmul.f32 %v258, %v257
    %v260 = vmul.f32 %v230, %v144
    %v261 = vadd.f32 %v259, %v260
    %vm262 = vcmp.gt.s32.totalorder %v130, 0
    %v263 = vsel %vm262, 1, 0
    %264 = vset.pattern.permute.xlu0 0
    %265 = vperm.xlu0 %264, %v263
    %v266 = vpop.permute.xlu0 %265
    %vm267 = vcmp.eq.s32.totalorder %v266, 1
    %v268 = vsel %vm267, %v261, %v144
    %v269 = vsel %vm267, %v261, 0.0
    %270 = vst.msk [vmem:[#allocation13] sm:$0xff] %vm146, %v269
    %s271 = scalar_lea.vmem [#allocation2], 8
    %v272 = vld [vmem:[%s271] sm:$0xff]
    %v274 = vsel %vm146, %v268, 0
    %276 = vmatpush.msra.mxu0 0.0
    %277 = vmatpush.msra.mxu0 0.0
    %278 = vmatpush.msra.mxu0 0.0
    %279 = vmatpush.msra.mxu0 0.0
    %280 = vmatpush.msra.mxu0 0.0
    %281 = vmatpush.msra.mxu0 0.0
    %282 = vmatpush.msra.mxu0 0.0
    %283 = vmatpush.msra.mxu0 0.0
    %284 = vmatpush.msra.mxu0 0.0
    %285 = vmatpush.msra.mxu0 0.0
    %286 = vmatpush.msra.mxu0 0.0
    %287 = vmatpush.msra.mxu0 0.0
    %288 = vmatpush.msra.mxu0 %v134
    %289 = vmatpush.msra.mxu0 %v133
    %290 = vmatpush.msra.mxu0 %v132
    %291 = vmatpush.msra.mxu0 %v131
    %292 = vmatmul.f32.gmra.mxu0 %v274
    %v293 = vpop.f32.mrf.mxu0
    %v294 = vadd.f32 0.0, %v293
    %295 = vdwg.mxu0
    %v296 = vadd.f32 %v272, %v294
    %v297 = vxor.u32 %v296, 2147483648
    %v298 = vmul.f32 %v297, 1.442695
    %v299 = vpow.pop %v298
    %v300 = vadd.f32 %v299, 1.0
    %v301 = vrcp.pop %v300
    %v302 = vmul.f32 %v300, %v301
    %v303 = vsub.f32 1.0, %v302
    %v304 = vmul.f32 %v301, %v303
    %v305 = vadd.f32 %v301, %v304
    %vm306 = vweird.f32 %v300
    %vm307 = vweird.f32 %v301
    %vm308 = vmor %vm306, %vm307
    %v309 = vsel %vm308, %v301, %v305
    %v310 = vand.u32 2147483647, %v300
    %vm311 = vcmp.eq.f32.partialorder %v310, 8.507059e+37
    %v312 = vand.u32 %v300, 2147483648
    %v313 = vor.u32 1.1754944e-38, %v312
    %v314 = vsel %vm311, %v313, %v309
    %v315 = vmul.f32 1.0, %v314
    %s316 = scalar_lea.vmem [#allocation5], 8
    %v317 = vld [vmem:[%s316] sm:$0xff]
    %318 = vmatpush.msra.mxu0 0.0
    %319 = vmatpush.msra.mxu0 0.0
    %320 = vmatpush.msra.mxu0 0.0
    %321 = vmatpush.msra.mxu0 0.0
    %322 = vmatpush.msra.mxu0 0.0
    %323 = vmatpush.msra.mxu0 0.0
    %324 = vmatpush.msra.mxu0 0.0
    %325 = vmatpush.msra.mxu0 0.0
    %326 = vmatpush.msra.mxu0 0.0
    %327 = vmatpush.msra.mxu0 0.0
    %328 = vmatpush.msra.mxu0 0.0
    %329 = vmatpush.msra.mxu0 0.0
    %330 = vmatpush.msra.mxu0 %v138
    %331 = vmatpush.msra.mxu0 %v137
    %332 = vmatpush.msra.mxu0 %v136
    %333 = vmatpush.msra.mxu0 %v135
    %334 = vmatmul.f32.gmra.mxu0 %v274
    %v335 = vpop.f32.mrf.mxu0
    %v336 = vadd.f32 0.0, %v335
    %337 = vdwg.mxu0
    %v338 = vadd.f32 %v317, %v336
    %v339 = vxor.u32 %v338, 2147483648
    %v340 = vmul.f32 %v339, 1.442695
    %v341 = vpow.pop %v340
    %v342 = vadd.f32 %v341, 1.0
    %v343 = vrcp.pop %v342
    %v344 = vmul.f32 %v342, %v343
    %v345 = vsub.f32 1.0, %v344
    %v346 = vmul.f32 %v343, %v345
    %v347 = vadd.f32 %v343, %v346
    %vm348 = vweird.f32 %v342
    %vm349 = vweird.f32 %v343
    %vm350 = vmor %vm348, %vm349
    %v351 = vsel %vm350, %v343, %v347
    %v352 = vand.u32 2147483647, %v342
    %vm353 = vcmp.eq.f32.partialorder %v352, 8.507059e+37
    %v354 = vand.u32 %v342, 2147483648
    %v355 = vor.u32 1.1754944e-38, %v354
    %v356 = vsel %vm353, %v355, %v351
    %v357 = vmul.f32 1.0, %v356
    %s358 = scalar_lea.vmem [#allocation7], 8
    %v359 = vld [vmem:[%s358] sm:$0xff]
    %360 = vmatpush.msra.mxu0 0.0
    %361 = vmatpush.msra.mxu0 0.0
    %362 = vmatpush.msra.mxu0 0.0
    %363 = vmatpush.msra.mxu0 0.0
    %364 = vmatpush.msra.mxu0 0.0
    %365 = vmatpush.msra.mxu0 0.0
    %366 = vmatpush.msra.mxu0 0.0
    %367 = vmatpush.msra.mxu0 0.0
    %368 = vmatpush.msra.mxu0 0.0
    %369 = vmatpush.msra.mxu0 0.0
    %370 = vmatpush.msra.mxu0 0.0
    %371 = vmatpush.msra.mxu0 0.0
    %372 = vmatpush.msra.mxu0 %v142
    %373 = vmatpush.msra.mxu0 %v141
    %374 = vmatpush.msra.mxu0 %v140
    %375 = vmatpush.msra.mxu0 %v139
    %376 = vmatmul.f32.gmra.mxu0 %v274
    %v377 = vpop.f32.mrf.mxu0
    %v378 = vadd.f32 %v233, %v377
    %379 = vdwg.mxu0
    %v380 = vmul.f32 %v315, %v378
    %v381 = vadd.f32 %v359, %v380
    %v382 = vtanh.pop %v381
    %v383 = vsub.f32 1.0, %v357
    %v384 = vmul.f32 %v383, %v382
    %v385 = vmul.f32 %v357, %v268
    %v386 = vadd.f32 %v384, %v385
    %vm387 = vcmp.gt.s32.totalorder %v130, 1
    %v388 = vsel %vm387, 1, 0
    %389 = vset.pattern.permute.xlu0 0
    %390 = vperm.xlu0 %389, %v388
    %v391 = vpop.permute.xlu0 %390
    %vm392 = vcmp.eq.s32.totalorder %v391, 1
    %v393 = vsel %vm392, %v386, %v268
    %v394 = vsel %vm392, %v386, 0.0
    %s395 = scalar_lea.vmem [#allocation13], 8
    %396 = vst.msk [vmem:[%s395] sm:$0xff] %vm146, %v394
    %s397 = scalar_lea.vmem [#allocation2], 16
    %v398 = vld [vmem:[%s397] sm:$0xff]
    %v400 = vsel %vm146, %v393, 0
    %402 = vmatpush.msra.mxu0 0.0
    %403 = vmatpush.msra.mxu0 0.0
    %404 = vmatpush.msra.mxu0 0.0
    %405 = vmatpush.msra.mxu0 0.0
    %406 = vmatpush.msra.mxu0 0.0
    %407 = vmatpush.msra.mxu0 0.0
    %408 = vmatpush.msra.mxu0 0.0
    %409 = vmatpush.msra.mxu0 0.0
    %410 = vmatpush.msra.mxu0 0.0
    %411 = vmatpush.msra.mxu0 0.0
    %412 = vmatpush.msra.mxu0 0.0
    %413 = vmatpush.msra.mxu0 0.0
    %414 = vmatpush.msra.mxu0 %v134
    %415 = vmatpush.msra.mxu0 %v133
    %416 = vmatpush.msra.mxu0 %v132
    %417 = vmatpush.msra.mxu0 %v131
    %418 = vmatmul.f32.gmra.mxu0 %v400
    %v419 = vpop.f32.mrf.mxu0
    %v420 = vadd.f32 0.0, %v419
    %421 = vdwg.mxu0
    %v422 = vadd.f32 %v398, %v420
    %v423 = vxor.u32 %v422, 2147483648
    %v424 = vmul.f32 %v423, 1.442695
    %v425 = vpow.pop %v424
    %v426 = vadd.f32 %v425, 1.0
    %v427 = vrcp.pop %v426
    %v428 = vmul.f32 %v426, %v427
    %v429 = vsub.f32 1.0, %v428
    %v430 = vmul.f32 %v427, %v429
    %v431 = vadd.f32 %v427, %v430
    %vm432 = vweird.f32 %v426
    %vm433 = vweird.f32 %v427
    %vm434 = vmor %vm432, %vm433
    %v435 = vsel %vm434, %v427, %v431
    %v436 = vand.u32 2147483647, %v426
    %vm437 = vcmp.eq.f32.partialorder %v436, 8.507059e+37
    %v438 = vand.u32 %v426, 2147483648
    %v439 = vor.u32 1.1754944e-38, %v438
    %v440 = vsel %vm437, %v439, %v435
    %v441 = vmul.f32 1.0, %v440
    %s442 = scalar_lea.vmem [#allocation5], 16
    %v443 = vld [vmem:[%s442] sm:$0xff]
    %444 = vmatpush.msra.mxu0 0.0
    %445 = vmatpush.msra.mxu0 0.0
    %446 = vmatpush.msra.mxu0 0.0
    %447 = vmatpush.msra.mxu0 0.0
    %448 = vmatpush.msra.mxu0 0.0
    %449 = vmatpush.msra.mxu0 0.0
    %450 = vmatpush.msra.mxu0 0.0
    %451 = vmatpush.msra.mxu0 0.0
    %452 = vmatpush.msra.mxu0 0.0
    %453 = vmatpush.msra.mxu0 0.0
    %454 = vmatpush.msra.mxu0 0.0
    %455 = vmatpush.msra.mxu0 0.0
    %456 = vmatpush.msra.mxu0 %v138
    %457 = vmatpush.msra.mxu0 %v137
    %458 = vmatpush.msra.mxu0 %v136
    %459 = vmatpush.msra.mxu0 %v135
    %460 = vmatmul.f32.gmra.mxu0 %v400
    %v461 = vpop.f32.mrf.mxu0
    %v462 = vadd.f32 0.0, %v461
    %463 = vdwg.mxu0
    %v464 = vadd.f32 %v443, %v462
    %v465 = vxor.u32 %v464, 2147483648
    %v466 = vmul.f32 %v465, 1.442695
    %v467 = vpow.pop %v466
    %v468 = vadd.f32 %v467, 1.0
    %v469 = vrcp.pop %v468
    %v470 = vmul.f32 %v468, %v469
    %v471 = vsub.f32 1.0, %v470
    %v472 = vmul.f32 %v469, %v471
    %v473 = vadd.f32 %v469, %v472
    %vm474 = vweird.f32 %v468
    %vm475 = vweird.f32 %v469
    %vm476 = vmor %vm474, %vm475
    %v477 = vsel %vm476, %v469, %v473
    %v478 = vand.u32 2147483647, %v468
    %vm479 = vcmp.eq.f32.partialorder %v478, 8.507059e+37
    %v480 = vand.u32 %v468, 2147483648
    %v481 = vor.u32 1.1754944e-38, %v480
    %v482 = vsel %vm479, %v481, %v477
    %v483 = vmul.f32 1.0, %v482
    %s484 = scalar_lea.vmem [#allocation7], 16
    %v485 = vld [vmem:[%s484] sm:$0xff]
    %486 = vmatpush.msra.mxu0 0.0
    %487 = vmatpush.msra.mxu0 0.0
    %488 = vmatpush.msra.mxu0 0.0
    %489 = vmatpush.msra.mxu0 0.0
    %490 = vmatpush.msra.mxu0 0.0
    %491 = vmatpush.msra.mxu0 0.0
    %492 = vmatpush.msra.mxu0 0.0
    %493 = vmatpush.msra.mxu0 0.0
    %494 = vmatpush.msra.mxu0 0.0
    %495 = vmatpush.msra.mxu0 0.0
    %496 = vmatpush.msra.mxu0 0.0
    %497 = vmatpush.msra.mxu0 0.0
    %498 = vmatpush.msra.mxu0 %v142
    %499 = vmatpush.msra.mxu0 %v141
    %500 = vmatpush.msra.mxu0 %v140
    %501 = vmatpush.msra.mxu0 %v139
    %502 = vmatmul.f32.gmra.mxu0 %v400
    %v503 = vpop.f32.mrf.mxu0
    %v504 = vadd.f32 %v233, %v503
    %505 = vdwg.mxu0
    %v506 = vmul.f32 %v441, %v504
    %v507 = vadd.f32 %v485, %v506
    %v508 = vtanh.pop %v507
    %v509 = vsub.f32 1.0, %v483
    %v510 = vmul.f32 %v509, %v508
    %v511 = vmul.f32 %v483, %v393
    %v512 = vadd.f32 %v510, %v511
    %vm513 = vcmp.gt.s32.totalorder %v130, 2
    %v514 = vsel %vm513, 1, 0
    %515 = vset.pattern.permute.xlu0 0
    %516 = vperm.xlu0 %515, %v514
    %v517 = vpop.permute.xlu0 %516
    %vm518 = vcmp.eq.s32.totalorder %v517, 1
    %v519 = vsel %vm518, %v512, %v393
    %v520 = vsel %vm518, %v512, 0.0
    %s521 = scalar_lea.vmem [#allocation13], 16
    %522 = vst.msk [vmem:[%s521] sm:$0xff] %vm146, %v520
    %s523 = scalar_lea.vmem [#allocation2], 24
    %v524 = vld [vmem:[%s523] sm:$0xff]
    %v526 = vsel %vm146, %v519, 0
    %528 = vmatpush.msra.mxu0 0.0
    %529 = vmatpush.msra.mxu0 0.0
    %530 = vmatpush.msra.mxu0 0.0
    %531 = vmatpush.msra.mxu0 0.0
    %532 = vmatpush.msra.mxu0 0.0
    %533 = vmatpush.msra.mxu0 0.0
    %534 = vmatpush.msra.mxu0 0.0
    %535 = vmatpush.msra.mxu0 0.0
    %536 = vmatpush.msra.mxu0 0.0
    %537 = vmatpush.msra.mxu0 0.0
    %538 = vmatpush.msra.mxu0 0.0
    %539 = vmatpush.msra.mxu0 0.0
    %540 = vmatpush.msra.mxu0 %v134
    %541 = vmatpush.msra.mxu0 %v133
    %542 = vmatpush.msra.mxu0 %v132
    %543 = vmatpush.msra.mxu0 %v131
    %544 = vmatmul.f32.gmra.mxu0 %v526
    %v545 = vpop.f32.mrf.mxu0
    %v546 = vadd.f32 0.0, %v545
    %547 = vdwg.mxu0
    %v548 = vadd.f32 %v524, %v546
    %v549 = vxor.u32 %v548, 2147483648
    %v550 = vmul.f32 %v549, 1.442695
    %v551 = vpow.pop %v550
    %v552 = vadd.f32 %v551, 1.0
    %v553 = vrcp.pop %v552
    %v554 = vmul.f32 %v552, %v553
    %v555 = vsub.f32 1.0, %v554
    %v556 = vmul.f32 %v553, %v555
    %v557 = vadd.f32 %v553, %v556
    %vm558 = vweird.f32 %v552
    %vm559 = vweird.f32 %v553
    %vm560 = vmor %vm558, %vm559
    %v561 = vsel %vm560, %v553, %v557
    %v562 = vand.u32 2147483647, %v552
    %vm563 = vcmp.eq.f32.partialorder %v562, 8.507059e+37
    %v564 = vand.u32 %v552, 2147483648
    %v565 = vor.u32 1.1754944e-38, %v564
    %v566 = vsel %vm563, %v565, %v561
    %v567 = vmul.f32 1.0, %v566
    %s568 = scalar_lea.vmem [#allocation5], 24
    %v569 = vld [vmem:[%s568] sm:$0xff]
    %570 = vmatpush.msra.mxu0 0.0
    %571 = vmatpush.msra.mxu0 0.0
    %572 = vmatpush.msra.mxu0 0.0
    %573 = vmatpush.msra.mxu0 0.0
    %574 = vmatpush.msra.mxu0 0.0
    %575 = vmatpush.msra.mxu0 0.0
    %576 = vmatpush.msra.mxu0 0.0
    %577 = vmatpush.msra.mxu0 0.0
    %578 = vmatpush.msra.mxu0 0.0
    %579 = vmatpush.msra.mxu0 0.0
    %580 = vmatpush.msra.mxu0 0.0
    %581 = vmatpush.msra.mxu0 0.0
    %582 = vmatpush.msra.mxu0 %v138
    %583 = vmatpush.msra.mxu0 %v137
    %584 = vmatpush.msra.mxu0 %v136
    %585 = vmatpush.msra.mxu0 %v135
    %586 = vmatmul.f32.gmra.mxu0 %v526
    %v587 = vpop.f32.mrf.mxu0
    %v588 = vadd.f32 0.0, %v587
    %589 = vdwg.mxu0
    %v590 = vadd.f32 %v569, %v588
    %v591 = vxor.u32 %v590, 2147483648
    %v592 = vmul.f32 %v591, 1.442695
    %v593 = vpow.pop %v592
    %v594 = vadd.f32 %v593, 1.0
    %v595 = vrcp.pop %v594
    %v596 = vmul.f32 %v594, %v595
    %v597 = vsub.f32 1.0, %v596
    %v598 = vmul.f32 %v595, %v597
    %v599 = vadd.f32 %v595, %v598
    %vm600 = vweird.f32 %v594
    %vm601 = vweird.f32 %v595
    %vm602 = vmor %vm600, %vm601
    %v603 = vsel %vm602, %v595, %v599
    %v604 = vand.u32 2147483647, %v594
    %vm605 = vcmp.eq.f32.partialorder %v604, 8.507059e+37
    %v606 = vand.u32 %v594, 2147483648
    %v607 = vor.u32 1.1754944e-38, %v606
    %v608 = vsel %vm605, %v607, %v603
    %v609 = vmul.f32 1.0, %v608
    %s610 = scalar_lea.vmem [#allocation7], 24
    %v611 = vld [vmem:[%s610] sm:$0xff]
    %612 = vmatpush.msra.mxu0 0.0
    %613 = vmatpush.msra.mxu0 0.0
    %614 = vmatpush.msra.mxu0 0.0
    %615 = vmatpush.msra.mxu0 0.0
    %616 = vmatpush.msra.mxu0 0.0
    %617 = vmatpush.msra.mxu0 0.0
    %618 = vmatpush.msra.mxu0 0.0
    %619 = vmatpush.msra.mxu0 0.0
    %620 = vmatpush.msra.mxu0 0.0
    %621 = vmatpush.msra.mxu0 0.0
    %622 = vmatpush.msra.mxu0 0.0
    %623 = vmatpush.msra.mxu0 0.0
    %624 = vmatpush.msra.mxu0 %v142
    %625 = vmatpush.msra.mxu0 %v141
    %626 = vmatpush.msra.mxu0 %v140
    %627 = vmatpush.msra.mxu0 %v139
    %628 = vmatmul.f32.gmra.mxu0 %v526
    %v629 = vpop.f32.mrf.mxu0
    %v630 = vadd.f32 %v233, %v629
    %631 = vdwg.mxu0
    %v632 = vmul.f32 %v567, %v630
    %v633 = vadd.f32 %v611, %v632
    %v634 = vtanh.pop %v633
    %v635 = vsub.f32 1.0, %v609
    %v636 = vmul.f32 %v635, %v634
    %v637 = vmul.f32 %v609, %v519
    %v638 = vadd.f32 %v636, %v637
    %vm639 = vcmp.gt.s32.totalorder %v130, 3
    %v640 = vsel %vm639, 1, 0
    %641 = vset.pattern.permute.xlu0 0
    %642 = vperm.xlu0 %641, %v640
    %v643 = vpop.permute.xlu0 %642
    %vm644 = vcmp.eq.s32.totalorder %v643, 1
    %v645 = vsel %vm644, %v638, %v519
    %v646 = vsel %vm644, %v638, 0.0
    %s647 = scalar_lea.vmem [#allocation13], 24
    %648 = vst.msk [vmem:[%s647] sm:$0xff] %vm146, %v646
    %s649 = scalar_lea.vmem [#allocation2], 32
    %v650 = vld [vmem:[%s649] sm:$0xff]
    %v652 = vsel %vm146, %v645, 0
    %654 = vmatpush.msra.mxu0 0.0
    %655 = vmatpush.msra.mxu0 0.0
    %656 = vmatpush.msra.mxu0 0.0
    %657 = vmatpush.msra.mxu0 0.0
    %658 = vmatpush.msra.mxu0 0.0
    %659 = vmatpush.msra.mxu0 0.0
    %660 = vmatpush.msra.mxu0 0.0
    %661 = vmatpush.msra.mxu0 0.0
    %662 = vmatpush.msra.mxu0 0.0
    %663 = vmatpush.msra.mxu0 0.0
    %664 = vmatpush.msra.mxu0 0.0
    %665 = vmatpush.msra.mxu0 0.0
    %666 = vmatpush.msra.mxu0 %v134
    %667 = vmatpush.msra.mxu0 %v133
    %668 = vmatpush.msra.mxu0 %v132
    %669 = vmatpush.msra.mxu0 %v131
    %670 = vmatmul.f32.gmra.mxu0 %v652
    %v671 = vpop.f32.mrf.mxu0
    %v672 = vadd.f32 0.0, %v671
    %673 = vdwg.mxu0
    %v674 = vadd.f32 %v650, %v672
    %v675 = vxor.u32 %v674, 2147483648
    %v676 = vmul.f32 %v675, 1.442695
    %v677 = vpow.pop %v676
    %v678 = vadd.f32 %v677, 1.0
    %v679 = vrcp.pop %v678
    %v680 = vmul.f32 %v678, %v679
    %v681 = vsub.f32 1.0, %v680
    %v682 = vmul.f32 %v679, %v681
    %v683 = vadd.f32 %v679, %v682
    %vm684 = vweird.f32 %v678
    %vm685 = vweird.f32 %v679
    %vm686 = vmor %vm684, %vm685
    %v687 = vsel %vm686, %v679, %v683
    %v688 = vand.u32 2147483647, %v678
    %vm689 = vcmp.eq.f32.partialorder %v688, 8.507059e+37
    %v690 = vand.u32 %v678, 2147483648
    %v691 = vor.u32 1.1754944e-38, %v690
    %v692 = vsel %vm689, %v691, %v687
    %v693 = vmul.f32 1.0, %v692
    %s694 = scalar_lea.vmem [#allocation5], 32
    %v695 = vld [vmem:[%s694] sm:$0xff]
    %696 = vmatpush.msra.mxu0 0.0
    %697 = vmatpush.msra.mxu0 0.0
    %698 = vmatpush.msra.mxu0 0.0
    %699 = vmatpush.msra.mxu0 0.0
    %700 = vmatpush.msra.mxu0 0.0
    %701 = vmatpush.msra.mxu0 0.0
    %702 = vmatpush.msra.mxu0 0.0
    %703 = vmatpush.msra.mxu0 0.0
    %704 = vmatpush.msra.mxu0 0.0
    %705 = vmatpush.msra.mxu0 0.0
    %706 = vmatpush.msra.mxu0 0.0
    %707 = vmatpush.msra.mxu0 0.0
    %708 = vmatpush.msra.mxu0 %v138
    %709 = vmatpush.msra.mxu0 %v137
    %710 = vmatpush.msra.mxu0 %v136
    %711 = vmatpush.msra.mxu0 %v135
    %712 = vmatmul.f32.gmra.mxu0 %v652
    %v713 = vpop.f32.mrf.mxu0
    %v714 = vadd.f32 0.0, %v713
    %715 = vdwg.mxu0
    %v716 = vadd.f32 %v695, %v714
    %v717 = vxor.u32 %v716, 2147483648
    %v718 = vmul.f32 %v717, 1.442695
    %v719 = vpow.pop %v718
    %v720 = vadd.f32 %v719, 1.0
    %v721 = vrcp.pop %v720
    %v722 = vmul.f32 %v720, %v721
    %v723 = vsub.f32 1.0, %v722
    %v724 = vmul.f32 %v721, %v723
    %v725 = vadd.f32 %v721, %v724
    %vm726 = vweird.f32 %v720
    %vm727 = vweird.f32 %v721
    %vm728 = vmor %vm726, %vm727
    %v729 = vsel %vm728, %v721, %v725
    %v730 = vand.u32 2147483647, %v720
    %vm731 = vcmp.eq.f32.partialorder %v730, 8.507059e+37
    %v732 = vand.u32 %v720, 2147483648
    %v733 = vor.u32 1.1754944e-38, %v732
    %v734 = vsel %vm731, %v733, %v729
    %v735 = vmul.f32 1.0, %v734
    %s736 = scalar_lea.vmem [#allocation7], 32
    %v737 = vld [vmem:[%s736] sm:$0xff]
    %738 = vmatpush.msra.mxu0 0.0
    %739 = vmatpush.msra.mxu0 0.0
    %740 = vmatpush.msra.mxu0 0.0
    %741 = vmatpush.msra.mxu0 0.0
    %742 = vmatpush.msra.mxu0 0.0
    %743 = vmatpush.msra.mxu0 0.0
    %744 = vmatpush.msra.mxu0 0.0
    %745 = vmatpush.msra.mxu0 0.0
    %746 = vmatpush.msra.mxu0 0.0
    %747 = vmatpush.msra.mxu0 0.0
    %748 = vmatpush.msra.mxu0 0.0
    %749 = vmatpush.msra.mxu0 0.0
    %750 = vmatpush.msra.mxu0 %v142
    %751 = vmatpush.msra.mxu0 %v141
    %752 = vmatpush.msra.mxu0 %v140
    %753 = vmatpush.msra.mxu0 %v139
    %754 = vmatmul.f32.gmra.mxu0 %v652
    %v755 = vpop.f32.mrf.mxu0
    %v756 = vadd.f32 %v233, %v755
    %757 = vdwg.mxu0
    %v758 = vmul.f32 %v693, %v756
    %v759 = vadd.f32 %v737, %v758
    %v760 = vtanh.pop %v759
    %v761 = vsub.f32 1.0, %v735
    %v762 = vmul.f32 %v761, %v760
    %v763 = vmul.f32 %v735, %v645
    %v764 = vadd.f32 %v762, %v763
    %vm765 = vcmp.gt.s32.totalorder %v130, 4
    %v766 = vsel %vm765, 1, 0
    %767 = vset.pattern.permute.xlu0 0
    %768 = vperm.xlu0 %767, %v766
    %v769 = vpop.permute.xlu0 %768
    %vm770 = vcmp.eq.s32.totalorder %v769, 1
    %v771 = vsel %vm770, %v764, %v645
    %v772 = vsel %vm770, %v764, 0.0
    %s773 = scalar_lea.vmem [#allocation13], 32
    %774 = vst.msk [vmem:[%s773] sm:$0xff] %vm146, %v772
    %s775 = scalar_lea.vmem [#allocation2], 40
    %v776 = vld [vmem:[%s775] sm:$0xff]
    %v778 = vsel %vm146, %v771, 0
    %780 = vmatpush.msra.mxu0 0.0
    %781 = vmatpush.msra.mxu0 0.0
    %782 = vmatpush.msra.mxu0 0.0
    %783 = vmatpush.msra.mxu0 0.0
    %784 = vmatpush.msra.mxu0 0.0
    %785 = vmatpush.msra.mxu0 0.0
    %786 = vmatpush.msra.mxu0 0.0
    %787 = vmatpush.msra.mxu0 0.0
    %788 = vmatpush.msra.mxu0 0.0
    %789 = vmatpush.msra.mxu0 0.0
    %790 = vmatpush.msra.mxu0 0.0
    %791 = vmatpush.msra.mxu0 0.0
    %792 = vmatpush.msra.mxu0 %v134
    %793 = vmatpush.msra.mxu0 %v133
    %794 = vmatpush.msra.mxu0 %v132
    %795 = vmatpush.msra.mxu0 %v131
    %796 = vmatmul.f32.gmra.mxu0 %v778
    %v797 = vpop.f32.mrf.mxu0
    %v798 = vadd.f32 0.0, %v797
    %799 = vdwg.mxu0
    %v800 = vadd.f32 %v776, %v798
    %v801 = vxor.u32 %v800, 2147483648
    %v802 = vmul.f32 %v801, 1.442695
    %v803 = vpow.pop %v802
    %v804 = vadd.f32 %v803, 1.0
    %v805 = vrcp.pop %v804
    %v806 = vmul.f32 %v804, %v805
    %v807 = vsub.f32 1.0, %v806
    %v808 = vmul.f32 %v805, %v807
    %v809 = vadd.f32 %v805, %v808
    %vm810 = vweird.f32 %v804
    %vm811 = vweird.f32 %v805
    %vm812 = vmor %vm810, %vm811
    %v813 = vsel %vm812, %v805, %v809
    %v814 = vand.u32 2147483647, %v804
    %vm815 = vcmp.eq.f32.partialorder %v814, 8.507059e+37
    %v816 = vand.u32 %v804, 2147483648
    %v817 = vor.u32 1.1754944e-38, %v816
    %v818 = vsel %vm815, %v817, %v813
    %v819 = vmul.f32 1.0, %v818
    %s820 = scalar_lea.vmem [#allocation5], 40
    %v821 = vld [vmem:[%s820] sm:$0xff]
    %822 = vmatpush.msra.mxu0 0.0
    %823 = vmatpush.msra.mxu0 0.0
    %824 = vmatpush.msra.mxu0 0.0
    %825 = vmatpush.msra.mxu0 0.0
    %826 = vmatpush.msra.mxu0 0.0
    %827 = vmatpush.msra.mxu0 0.0
    %828 = vmatpush.msra.mxu0 0.0
    %829 = vmatpush.msra.mxu0 0.0
    %830 = vmatpush.msra.mxu0 0.0
    %831 = vmatpush.msra.mxu0 0.0
    %832 = vmatpush.msra.mxu0 0.0
    %833 = vmatpush.msra.mxu0 0.0
    %834 = vmatpush.msra.mxu0 %v138
    %835 = vmatpush.msra.mxu0 %v137
    %836 = vmatpush.msra.mxu0 %v136
    %837 = vmatpush.msra.mxu0 %v135
    %838 = vmatmul.f32.gmra.mxu0 %v778
    %v839 = vpop.f32.mrf.mxu0
    %v840 = vadd.f32 0.0, %v839
    %841 = vdwg.mxu0
    %v842 = vadd.f32 %v821, %v840
    %v843 = vxor.u32 %v842, 2147483648
    %v844 = vmul.f32 %v843, 1.442695
    %v845 = vpow.pop %v844
    %v846 = vadd.f32 %v845, 1.0
    %v847 = vrcp.pop %v846
    %v848 = vmul.f32 %v846, %v847
    %v849 = vsub.f32 1.0, %v848
    %v850 = vmul.f32 %v847, %v849
    %v851 = vadd.f32 %v847, %v850
    %vm852 = vweird.f32 %v846
    %vm853 = vweird.f32 %v847
    %vm854 = vmor %vm852, %vm853
    %v855 = vsel %vm854, %v847, %v851
    %v856 = vand.u32 2147483647, %v846
    %vm857 = vcmp.eq.f32.partialorder %v856, 8.507059e+37
    %v858 = vand.u32 %v846, 2147483648
    %v859 = vor.u32 1.1754944e-38, %v858
    %v860 = vsel %vm857, %v859, %v855
    %v861 = vmul.f32 1.0, %v860
    %s862 = scalar_lea.vmem [#allocation7], 40
    %v863 = vld [vmem:[%s862] sm:$0xff]
    %864 = vmatpush.msra.mxu0 0.0
    %865 = vmatpush.msra.mxu0 0.0
    %866 = vmatpush.msra.mxu0 0.0
    %867 = vmatpush.msra.mxu0 0.0
    %868 = vmatpush.msra.mxu0 0.0
    %869 = vmatpush.msra.mxu0 0.0
    %870 = vmatpush.msra.mxu0 0.0
    %871 = vmatpush.msra.mxu0 0.0
    %872 = vmatpush.msra.mxu0 0.0
    %873 = vmatpush.msra.mxu0 0.0
    %874 = vmatpush.msra.mxu0 0.0
    %875 = vmatpush.msra.mxu0 0.0
    %876 = vmatpush.msra.mxu0 %v142
    %877 = vmatpush.msra.mxu0 %v141
    %878 = vmatpush.msra.mxu0 %v140
    %879 = vmatpush.msra.mxu0 %v139
    %880 = vmatmul.f32.gmra.mxu0 %v778
    %v881 = vpop.f32.mrf.mxu0
    %v882 = vadd.f32 %v233, %v881
    %883 = vdwg.mxu0
    %v884 = vmul.f32 %v819, %v882
    %v885 = vadd.f32 %v863, %v884
    %v886 = vtanh.pop %v885
    %v887 = vsub.f32 1.0, %v861
    %v888 = vmul.f32 %v887, %v886
    %v889 = vmul.f32 %v861, %v771
    %v890 = vadd.f32 %v888, %v889
    %vm891 = vcmp.gt.s32.totalorder %v130, 5
    %v892 = vsel %vm891, 1, 0
    %893 = vset.pattern.permute.xlu0 0
    %894 = vperm.xlu0 %893, %v892
    %v895 = vpop.permute.xlu0 %894
    %vm896 = vcmp.eq.s32.totalorder %v895, 1
    %v897 = vsel %vm896, %v890, %v771
    %v898 = vsel %vm896, %v890, 0.0
    %s899 = scalar_lea.vmem [#allocation13], 40
    %900 = vst.msk [vmem:[%s899] sm:$0xff] %vm146, %v898
    %s901 = scalar_lea.vmem [#allocation2], 48
    %v902 = vld [vmem:[%s901] sm:$0xff]
    %v904 = vsel %vm146, %v897, 0
    %906 = vmatpush.msra.mxu0 0.0
    %907 = vmatpush.msra.mxu0 0.0
    %908 = vmatpush.msra.mxu0 0.0
    %909 = vmatpush.msra.mxu0 0.0
    %910 = vmatpush.msra.mxu0 0.0
    %911 = vmatpush.msra.mxu0 0.0
    %912 = vmatpush.msra.mxu0 0.0
    %913 = vmatpush.msra.mxu0 0.0
    %914 = vmatpush.msra.mxu0 0.0
    %915 = vmatpush.msra.mxu0 0.0
    %916 = vmatpush.msra.mxu0 0.0
    %917 = vmatpush.msra.mxu0 0.0
    %918 = vmatpush.msra.mxu0 %v134
    %919 = vmatpush.msra.mxu0 %v133
    %920 = vmatpush.msra.mxu0 %v132
    %921 = vmatpush.msra.mxu0 %v131
    %922 = vmatmul.f32.gmra.mxu0 %v904
    %v923 = vpop.f32.mrf.mxu0
    %v924 = vadd.f32 0.0, %v923
    %925 = vdwg.mxu0
    %v926 = vadd.f32 %v902, %v924
    %v927 = vxor.u32 %v926, 2147483648
    %v928 = vmul.f32 %v927, 1.442695
    %v929 = vpow.pop %v928
    %v930 = vadd.f32 %v929, 1.0
    %v931 = vrcp.pop %v930
    %v932 = vmul.f32 %v930, %v931
    %v933 = vsub.f32 1.0, %v932
    %v934 = vmul.f32 %v931, %v933
    %v935 = vadd.f32 %v931, %v934
    %vm936 = vweird.f32 %v930
    %vm937 = vweird.f32 %v931
    %vm938 = vmor %vm936, %vm937
    %v939 = vsel %vm938, %v931, %v935
    %v940 = vand.u32 2147483647, %v930
    %vm941 = vcmp.eq.f32.partialorder %v940, 8.507059e+37
    %v942 = vand.u32 %v930, 2147483648
    %v943 = vor.u32 1.1754944e-38, %v942
    %v944 = vsel %vm941, %v943, %v939
    %v945 = vmul.f32 1.0, %v944
    %s946 = scalar_lea.vmem [#allocation5], 48
    %v947 = vld [vmem:[%s946] sm:$0xff]
    %948 = vmatpush.msra.mxu0 0.0
    %949 = vmatpush.msra.mxu0 0.0
    %950 = vmatpush.msra.mxu0 0.0
    %951 = vmatpush.msra.mxu0 0.0
    %952 = vmatpush.msra.mxu0 0.0
    %953 = vmatpush.msra.mxu0 0.0
    %954 = vmatpush.msra.mxu0 0.0
    %955 = vmatpush.msra.mxu0 0.0
    %956 = vmatpush.msra.mxu0 0.0
    %957 = vmatpush.msra.mxu0 0.0
    %958 = vmatpush.msra.mxu0 0.0
    %959 = vmatpush.msra.mxu0 0.0
    %960 = vmatpush.msra.mxu0 %v138
    %961 = vmatpush.msra.mxu0 %v137
    %962 = vmatpush.msra.mxu0 %v136
    %963 = vmatpush.msra.mxu0 %v135
    %964 = vmatmul.f32.gmra.mxu0 %v904
    %v965 = vpop.f32.mrf.mxu0
    %v966 = vadd.f32 0.0, %v965
    %967 = vdwg.mxu0
    %v968 = vadd.f32 %v947, %v966
    %v969 = vxor.u32 %v968, 2147483648
    %v970 = vmul.f32 %v969, 1.442695
    %v971 = vpow.pop %v970
    %v972 = vadd.f32 %v971, 1.0
    %v973 = vrcp.pop %v972
    %v974 = vmul.f32 %v972, %v973
    %v975 = vsub.f32 1.0, %v974
    %v976 = vmul.f32 %v973, %v975
    %v977 = vadd.f32 %v973, %v976
    %vm978 = vweird.f32 %v972
    %vm979 = vweird.f32 %v973
    %vm980 = vmor %vm978, %vm979
    %v981 = vsel %vm980, %v973, %v977
    %v982 = vand.u32 2147483647, %v972
    %vm983 = vcmp.eq.f32.partialorder %v982, 8.507059e+37
    %v984 = vand.u32 %v972, 2147483648
    %v985 = vor.u32 1.1754944e-38, %v984
    %v986 = vsel %vm983, %v985, %v981
    %v987 = vmul.f32 1.0, %v986
    %s988 = scalar_lea.vmem [#allocation7], 48
    %v989 = vld [vmem:[%s988] sm:$0xff]
    %990 = vmatpush.msra.mxu0 0.0
    %991 = vmatpush.msra.mxu0 0.0
    %992 = vmatpush.msra.mxu0 0.0
    %993 = vmatpush.msra.mxu0 0.0
    %994 = vmatpush.msra.mxu0 0.0
    %995 = vmatpush.msra.mxu0 0.0
    %996 = vmatpush.msra.mxu0 0.0
    %997 = vmatpush.msra.mxu0 0.0
    %998 = vmatpush.msra.mxu0 0.0
    %999 = vmatpush.msra.mxu0 0.0
    %1000 = vmatpush.msra.mxu0 0.0
    %1001 = vmatpush.msra.mxu0 0.0
    %1002 = vmatpush.msra.mxu0 %v142
    %1003 = vmatpush.msra.mxu0 %v141
    %1004 = vmatpush.msra.mxu0 %v140
    %1005 = vmatpush.msra.mxu0 %v139
    %1006 = vmatmul.f32.gmra.mxu0 %v904
    %v1007 = vpop.f32.mrf.mxu0
    %v1008 = vadd.f32 %v233, %v1007
    %1009 = vdwg.mxu0
    %v1010 = vmul.f32 %v945, %v1008
    %v1011 = vadd.f32 %v989, %v1010
    %v1012 = vtanh.pop %v1011
    %v1013 = vsub.f32 1.0, %v987
    %v1014 = vmul.f32 %v1013, %v1012
    %v1015 = vmul.f32 %v987, %v897
    %v1016 = vadd.f32 %v1014, %v1015
    %vm1017 = vcmp.gt.s32.totalorder %v130, 6
    %v1018 = vsel %vm1017, 1, 0
    %1019 = vset.pattern.permute.xlu0 0
    %1020 = vperm.xlu0 %1019, %v1018
    %v1021 = vpop.permute.xlu0 %1020
    %vm1022 = vcmp.eq.s32.totalorder %v1021, 1
    %v1023 = vsel %vm1022, %v1016, %v897
    %v1024 = vsel %vm1022, %v1016, 0.0
    %s1025 = scalar_lea.vmem [#allocation13], 48
    %1026 = vst.msk [vmem:[%s1025] sm:$0xff] %vm146, %v1024
    %s1027 = scalar_lea.vmem [#allocation2], 56
    %v1028 = vld [vmem:[%s1027] sm:$0xff]
    %v1030 = vsel %vm146, %v1023, 0
    %1032 = vmatpush.msra.mxu0 0.0
    %1033 = vmatpush.msra.mxu0 0.0
    %1034 = vmatpush.msra.mxu0 0.0
    %1035 = vmatpush.msra.mxu0 0.0
    %1036 = vmatpush.msra.mxu0 0.0
    %1037 = vmatpush.msra.mxu0 0.0
    %1038 = vmatpush.msra.mxu0 0.0
    %1039 = vmatpush.msra.mxu0 0.0
    %1040 = vmatpush.msra.mxu0 0.0
    %1041 = vmatpush.msra.mxu0 0.0
    %1042 = vmatpush.msra.mxu0 0.0
    %1043 = vmatpush.msra.mxu0 0.0
    %1044 = vmatpush.msra.mxu0 %v134
    %1045 = vmatpush.msra.mxu0 %v133
    %1046 = vmatpush.msra.mxu0 %v132
    %1047 = vmatpush.msra.mxu0 %v131
    %1048 = vmatmul.f32.gmra.mxu0 %v1030
    %v1049 = vpop.f32.mrf.mxu0
    %v1050 = vadd.f32 0.0, %v1049
    %1051 = vdwg.mxu0
    %v1052 = vadd.f32 %v1028, %v1050
    %v1053 = vxor.u32 %v1052, 2147483648
    %v1054 = vmul.f32 %v1053, 1.442695
    %v1055 = vpow.pop %v1054
    %v1056 = vadd.f32 %v1055, 1.0
    %v1057 = vrcp.pop %v1056
    %v1058 = vmul.f32 %v1056, %v1057
    %v1059 = vsub.f32 1.0, %v1058
    %v1060 = vmul.f32 %v1057, %v1059
    %v1061 = vadd.f32 %v1057, %v1060
    %vm1062 = vweird.f32 %v1056
    %vm1063 = vweird.f32 %v1057
    %vm1064 = vmor %vm1062, %vm1063
    %v1065 = vsel %vm1064, %v1057, %v1061
    %v1066 = vand.u32 2147483647, %v1056
    %vm1067 = vcmp.eq.f32.partialorder %v1066, 8.507059e+37
    %v1068 = vand.u32 %v1056, 2147483648
    %v1069 = vor.u32 1.1754944e-38, %v1068
    %v1070 = vsel %vm1067, %v1069, %v1065
    %v1071 = vmul.f32 1.0, %v1070
    %s1072 = scalar_lea.vmem [#allocation5], 56
    %v1073 = vld [vmem:[%s1072] sm:$0xff]
    %1074 = vmatpush.msra.mxu0 0.0
    %1075 = vmatpush.msra.mxu0 0.0
    %1076 = vmatpush.msra.mxu0 0.0
    %1077 = vmatpush.msra.mxu0 0.0
    %1078 = vmatpush.msra.mxu0 0.0
    %1079 = vmatpush.msra.mxu0 0.0
    %1080 = vmatpush.msra.mxu0 0.0
    %1081 = vmatpush.msra.mxu0 0.0
    %1082 = vmatpush.msra.mxu0 0.0
    %1083 = vmatpush.msra.mxu0 0.0
    %1084 = vmatpush.msra.mxu0 0.0
    %1085 = vmatpush.msra.mxu0 0.0
    %1086 = vmatpush.msra.mxu0 %v138
    %1087 = vmatpush.msra.mxu0 %v137
    %1088 = vmatpush.msra.mxu0 %v136
    %1089 = vmatpush.msra.mxu0 %v135
    %1090 = vmatmul.f32.gmra.mxu0 %v1030
    %v1091 = vpop.f32.mrf.mxu0
    %v1092 = vadd.f32 0.0, %v1091
    %1093 = vdwg.mxu0
    %v1094 = vadd.f32 %v1073, %v1092
    %v1095 = vxor.u32 %v1094, 2147483648
    %v1096 = vmul.f32 %v1095, 1.442695
    %v1097 = vpow.pop %v1096
    %v1098 = vadd.f32 %v1097, 1.0
    %v1099 = vrcp.pop %v1098
    %v1100 = vmul.f32 %v1098, %v1099
    %v1101 = vsub.f32 1.0, %v1100
    %v1102 = vmul.f32 %v1099, %v1101
    %v1103 = vadd.f32 %v1099, %v1102
    %vm1104 = vweird.f32 %v1098
    %vm1105 = vweird.f32 %v1099
    %vm1106 = vmor %vm1104, %vm1105
    %v1107 = vsel %vm1106, %v1099, %v1103
    %v1108 = vand.u32 2147483647, %v1098
    %vm1109 = vcmp.eq.f32.partialorder %v1108, 8.507059e+37
    %v1110 = vand.u32 %v1098, 2147483648
    %v1111 = vor.u32 1.1754944e-38, %v1110
    %v1112 = vsel %vm1109, %v1111, %v1107
    %v1113 = vmul.f32 1.0, %v1112
    %s1114 = scalar_lea.vmem [#allocation7], 56
    %v1115 = vld [vmem:[%s1114] sm:$0xff]
    %1116 = vmatpush.msra.mxu0 0.0
    %1117 = vmatpush.msra.mxu0 0.0
    %1118 = vmatpush.msra.mxu0 0.0
    %1119 = vmatpush.msra.mxu0 0.0
    %1120 = vmatpush.msra.mxu0 0.0
    %1121 = vmatpush.msra.mxu0 0.0
    %1122 = vmatpush.msra.mxu0 0.0
    %1123 = vmatpush.msra.mxu0 0.0
    %1124 = vmatpush.msra.mxu0 0.0
    %1125 = vmatpush.msra.mxu0 0.0
    %1126 = vmatpush.msra.mxu0 0.0
    %1127 = vmatpush.msra.mxu0 0.0
    %1128 = vmatpush.msra.mxu0 %v142
    %1129 = vmatpush.msra.mxu0 %v141
    %1130 = vmatpush.msra.mxu0 %v140
    %1131 = vmatpush.msra.mxu0 %v139
    %1132 = vmatmul.f32.gmra.mxu0 %v1030
    %v1133 = vpop.f32.mrf.mxu0
    %v1134 = vadd.f32 %v233, %v1133
    %1135 = vdwg.mxu0
    %v1136 = vmul.f32 %v1071, %v1134
    %v1137 = vadd.f32 %v1115, %v1136
    %v1138 = vtanh.pop %v1137
    %v1139 = vsub.f32 1.0, %v1113
    %v1140 = vmul.f32 %v1139, %v1138
    %v1141 = vmul.f32 %v1113, %v1023
    %v1142 = vadd.f32 %v1140, %v1141
    %vm1143 = vcmp.gt.s32.totalorder %v130, 7
    %v1144 = vsel %vm1143, 1, 0
    %1145 = vset.pattern.permute.xlu0 0
    %1146 = vperm.xlu0 %1145, %v1144
    %v1147 = vpop.permute.xlu0 %1146
    %vm1148 = vcmp.eq.s32.totalorder %v1147, 1
    %v1149 = vsel %vm1148, %v1142, %v1023
    %v1150 = vsel %vm1148, %v1142, 0.0
    %s1151 = scalar_lea.vmem [#allocation13], 56
    %1152 = vst.msk [vmem:[%s1151] sm:$0xff] %vm146, %v1150
    %1153 = vst.msk [vmem:[#allocation14] sm:$0xff] %vm146, %v1149
    // Predicated region
    $region62: #{tpu_custom_call.1} parent=1 // pred_check
      _
    $region63: #{tpu_custom_call.1} parent=1 // pred_check_branch
      %1155 = sbr.rel (0) target = $region65
    $region64: #{tpu_custom_call.1} parent=1 // pred_region
      %1157 = vsyncadd [#allocation4], 0
      %s1158 = sshll.u32 [#allocation13], 4
      %s1159 = int_to_ptr.vmem [resolvable:$true] %s1158
      %s1160 = sshll.u32 %s9, 4
      %s1161 = int_to_ptr.hbm [resolvable:$true] %s1160
      %1166 = dma.vmem_to_hbm [thread:$0]  %s1159, 1024, %s1161, [#allocation4], 128, 128, 8
    $region65: #{tpu_custom_call.1} parent=1 // pred_fallthru
      _
    // Predicated region
    $region66: #{tpu_custom_call.1} parent=1 // pred_check
      _
    $region67: #{tpu_custom_call.1} parent=1 // pred_check_branch
      %1168 = sbr.rel (0) target = $region69
    $region68: #{tpu_custom_call.1} parent=1 // pred_region
      %1170 = vsyncadd [#allocation15], 0
      %s1172 = sshll.u32 [#allocation14], 4
      %s1173 = int_to_ptr.vmem [resolvable:$true] %s1172
      %s1174 = sshll.u32 %s10, 4
      %s1175 = int_to_ptr.hbm [resolvable:$true] %s1174
      %1177 = dma.vmem_to_hbm [thread:$0]  %s1173, 128, %s1175, [#allocation15]
    $region69: #{tpu_custom_call.1} parent=1 // pred_fallthru
      _
    // Predicated region
    $region70: #{tpu_custom_call.1} parent=1 // pred_check
      _
    $region71: #{tpu_custom_call.1} parent=1 // pred_check_branch
      %1179 = sbr.rel (0) target = $region73
    $region72: #{tpu_custom_call.1} parent=1 // pred_region
      %1181 = dma.done [#allocation4], 1024
    $region73: #{tpu_custom_call.1} parent=1 // pred_fallthru
      _
    // Predicated region
    $region74: #{tpu_custom_call.1} parent=1 // pred_check
      _
    $region75: #{tpu_custom_call.1} parent=1 // pred_check_branch
      %1183 = sbr.rel (0) target = $region77
    $region76: #{tpu_custom_call.1} parent=1 // pred_region
      %1185 = dma.done [#allocation15], 128
    $region77: #{tpu_custom_call.1} parent=1 // pred_fallthru
      _
    %1186 = vsyncpa [#allocation3], 1
    %1187 = vsyncpa [#allocation6], 1
    %1188 = vsyncpa [#allocation9], 1
    %1189 = vsyncpa [#allocation12], 1
    %1190 = vsyncpa [#allocation4], 1
    %1191 = vsyncpa [#allocation15], 1

</llo_original>
